<compile_context>
chip_gen: v6e
topology: v6e:2x2x1
jax: 0.10.0
libtpu: 0.0.40
codegen_flags: <defaults>
</compile_context>

<pallas_src>
import functools

import jax
import jax.numpy as jnp
from jax.experimental import pallas as pl
from jax.experimental.pallas import tpu as pltpu

_EPS = 1e-5  # nn.BatchNorm2d default eps


def _conv_tile(xm_ref, xh_ref, w_ref, acc_ref):
    """3x3/stride-2 conv for one (sample, row-tile) block via four 2x2 taps.

    xm_ref:  (TH, Wp, C4) bf16  space-to-depth rows [h*TH, h*TH + TH)
    xh_ref:  (1,  Wp, C4) bf16  halo row h*TH + TH (last output row, a=1 taps)
    w_ref:   (4, C4, O_pad) bf16  per-tap weights, tap index = 2*a + b
    acc_ref: (TH*W_out, O_pad) f32 scratch; filled with the pre-BN conv output
             (flattened output positions on the sublane axis).
    """
    TH, Wp, C4 = xm_ref.shape
    Wo = Wp - 1
    R = TH * Wo
    f32 = jnp.float32

    # ---- a = 0 taps: every output row reads its own input row from xm. ----
    acc_ref[...] = (
        jnp.dot(xm_ref[:, 0:Wo, :].reshape(R, C4), w_ref[0],
                preferred_element_type=f32)
        + jnp.dot(xm_ref[:, 1:Wp, :].reshape(R, C4), w_ref[1],
                  preferred_element_type=f32))

    # ---- a = 1 taps: output rows 0..TH-2 read xm rows 1..TH-1 (no slab copy). ----
    if TH > 1:
        Rm = (TH - 1) * Wo
        acc_ref[pl.ds(0, Rm), :] += (
            jnp.dot(xm_ref[1:TH, 0:Wo, :].reshape(Rm, C4), w_ref[2],
                    preferred_element_type=f32)
            + jnp.dot(xm_ref[1:TH, 1:Wp, :].reshape(Rm, C4), w_ref[3],
                      preferred_element_type=f32))

    # ---- a = 1 taps, last output row: read the 1-row halo block. ----
    acc_ref[pl.ds((TH - 1) * Wo, Wo), :] += (
        jnp.dot(xh_ref[0, 0:Wo, :], w_ref[2], preferred_element_type=f32)
        + jnp.dot(xh_ref[0, 1:Wp, :], w_ref[3], preferred_element_type=f32))


def _stats_kernel(xm_ref, xh_ref, w_ref, sum_ref, ssq_ref, acc_ref):
    # Per-sample, per-channel sum / sum-of-squares of the pre-BN conv output
    # (single-pass stats; var = E[y^2] - E[y]^2 is formed later in XLA).
    # TODO(synk): switch to a shifted / Welford accumulation if f32 cancellation
    # in E[y^2] - E[y]^2 ever limits accuracy.
    @pl.when(pl.program_id(1) == 0)
    def _():
        sum_ref[...] = jnp.zeros_like(sum_ref)
        ssq_ref[...] = jnp.zeros_like(ssq_ref)

    _conv_tile(xm_ref, xh_ref, w_ref, acc_ref)
    y = acc_ref[...]
    sum_ref[...] += jnp.sum(y, axis=0, keepdims=True)
    ssq_ref[...] += jnp.sum(y * y, axis=0, keepdims=True)


def _apply_kernel(xm_ref, xh_ref, w_ref, scale_ref, shift_ref, o_ref, acc_ref):
    # Recompute the conv for this tile and apply the folded BN scale/shift.
    # (O, TH*W_out) orientation -> lane-dense FMA/stores, NCHW by pure reshape.
    _conv_tile(xm_ref, xh_ref, w_ref, acc_ref)
    O = o_ref.shape[0]
    y_t = acc_ref[...].T                           # (O_pad, TH*W_out), tile-aligned
    o_ref[...] = (y_t[0:O, :] * scale_ref[...] + shift_ref[...]).astype(o_ref.dtype)


def _vmem_limit_bytes():
    """Scoped-VMEM budget per generation (v5e/v6e: 128 MiB -> ~96 MiB scoped;
    v7x: 64 MiB -> ~48 MiB scoped)."""
    cap = 64 * 1024 * 1024
    try:
        cap = int(getattr(pltpu.get_tpu_info(), "vmem_capacity_bytes", cap))
    except Exception:
        pass
    return max(32 * 1024 * 1024, min(int(0.75 * cap), 100 * 1024 * 1024))


def _pick_row_tile(h_out, w_out, c4, o, o_pad, budget_bytes):
    """Largest divisor TH of h_out whose working set fits the budget and whose
    flattened row tile is lane-aligned (TH*w_out % 128 == 0) or whole-sample."""
    wp = w_out + 1

    def tile_bytes(th):
        r = th * w_out
        return (2 * th * wp * c4 * 2        # main input block (double-buffered bf16)
                + 2 * wp * c4 * 2           # halo row          (double-buffered bf16)
                + 2 * o * r * 4             # output block      (double-buffered f32)
                + r * o_pad * 4             # f32 accumulator scratch
                + 2 * r * c4 * 2            # materialized tap windows feeding the MXU
                + 2 * 4 * c4 * o_pad * 2)   # tap weights

    divisors = [t for t in range(1, h_out + 1) if h_out % t == 0]
    for th in sorted(divisors, reverse=True):            # biggest tile that fits
        if (th == h_out or (th * w_out) % 128 == 0) and tile_bytes(th) <= budget_bytes:
            return th
    for th in divisors:                                   # smallest lane-aligned fallback
        if th == h_out or (th * w_out) % 128 == 0:
            return th
    return h_out


@functools.partial(jax.jit, static_argnames=("factor",))
def downsample(x_nchw, weight, bias, gamma, beta, factor=2):
    """DownSample.forward: Conv2d(3x3, stride=factor, pad=1) + BatchNorm2d (train)."""
    del bias  # exactly cancelled by the training-mode BN mean subtraction
    assert factor == 2, "kernel specialised to factor=2 (module default)"
    # TODO(synk): generalise the space-to-depth decomposition to factor != 2 and
    # to odd spatial sizes (the PyTorch module accepts both).
    N, C, H, W = x_nchw.shape
    O = weight.shape[0]
    assert H % 2 == 0 and W % 2 == 0
    H_out, W_out = H // 2, W // 2
    Hp, Wp, C4 = H_out + 1, W_out + 1, 4 * C
    HW = H_out * W_out
    R_total = N * HW
    O_pad = ((O + 127) // 128) * 128   # free on the MXU; keeps acc tile-aligned

    # ---- layout-only glue: NCHW -> padded NHWC -> space-to-depth (factor 2) ----
    # TODO(synk): verify in HLO that this prologue fuses into one pass over x;
    # otherwise fold the relayout into a small Pallas prologue kernel.
    xh = jnp.transpose(x_nchw, (0, 2, 3, 1))
    xh = jnp.pad(xh, ((0, 0), (1, 1), (1, 1), (0, 0)))
    s2d = (xh.reshape(N, Hp, 2, Wp, 2, C)
             .transpose(0, 1, 3, 2, 4, 5)
             .reshape(N, Hp, Wp, C4)
             .astype(jnp.bfloat16))

    # ---- weights: OIHW 3x3 -> four (C4, O_pad) tap matrices over s2d channels ----
    w = jnp.asarray(weight, jnp.float32)
    w2 = jnp.zeros((2, 2, C4, O), jnp.float32)
    for a in range(2):
        for b in range(2):
            for r in range(2):
                for s in range(2):
                    kh, kw = 2 * a + r, 2 * b + s
                    if kh < 3 and kw < 3:
                        u = (2 * r + s) * C
                        w2 = w2.at[a, b, u:u + C, :].set(jnp.transpose(w[:, :, kh, kw]))
    w2 = jnp.pad(w2.reshape(4, C4, O), ((0, 0), (0, 0), (0, O_pad - O)))
    w2 = w2.astype(jnp.bfloat16)

    vmem_limit = _vmem_limit_bytes()
    TH = _pick_row_tile(H_out, W_out, C4, O, O_pad, int(0.8 * vmem_limit))
    n_ht = H_out // TH
    R = TH * W_out

    x_main_spec = pl.BlockSpec((None, TH, Wp, C4), lambda n, h: (n, h, 0, 0))
    x_halo_spec = pl.BlockSpec((None, 1, Wp, C4),
                               lambda n, h: (n, (h + 1) * TH, 0, 0))
    w_spec = pl.BlockSpec((4, C4, O_pad), lambda n, h: (0, 0, 0))
    acc_scratch = [pltpu.VMEM((R, O_pad), jnp.float32)]

    flops = 2 * R_total * 9 * C * O
    in_bytes = s2d.size * 2 + w2.size * 2

    # ---- pass 1: per-sample, per-channel sum / sumsq of the pre-BN conv ----
    stat_spec = pl.BlockSpec((None, 1, O_pad), lambda n, h: (n, 0, 0))
    y_sum, y_ssq = pl.pallas_call(
        _stats_kernel,
        out_shape=(jax.ShapeDtypeStruct((N, 1, O_pad), jnp.float32),
                   jax.ShapeDtypeStruct((N, 1, O_pad), jnp.float32)),
        grid=(N, n_ht),
        in_specs=[x_main_spec, x_halo_spec, w_spec],
        out_specs=(stat_spec, stat_spec),
        scratch_shapes=acc_scratch,
        compiler_params=pltpu.CompilerParams(
            dimension_semantics=("parallel", "arbitrary"),
            vmem_limit_bytes=vmem_limit),
        cost_estimate=pl.CostEstimate(flops=flops, transcendentals=0,
                                      bytes_accessed=in_bytes + 2 * N * O_pad * 4),
    )(s2d, s2d, w2)

    # ---- fold BN (training-mode batch stats) into one scale/shift per channel ----
    y_sum = jnp.sum(y_sum, axis=0)[:, :O]          # (1, O)
    y_ssq = jnp.sum(y_ssq, axis=0)[:, :O]
    mean = y_sum / R_total
    var = jnp.maximum(y_ssq / R_total - mean * mean, 0.0)
    inv = jax.lax.rsqrt(var + _EPS)
    scale = gamma.reshape(1, O).astype(jnp.float32) * inv
    shift = beta.reshape(1, O).astype(jnp.float32) - mean * scale
    scale = scale.reshape(O, 1)
    shift = shift.reshape(O, 1)
    vec_spec = pl.BlockSpec((O, 1), lambda n, h: (0, 0))

    # ---- pass 2: recompute conv, fused scale/shift, NCHW-ordered output ----
    # TODO(synk): for modules with O < 2C, streaming the bf16 conv output from
    # pass 1 and making pass 2 a pure scale/shift moves fewer HBM bytes than the
    # recompute; at this module's O == 2C it is a wash, so keep the recompute.
    out_flat = pl.pallas_call(
        _apply_kernel,
        out_shape=jax.ShapeDtypeStruct((N, O, HW), jnp.float32),
        grid=(N, n_ht),
        in_specs=[x_main_spec, x_halo_spec, w_spec, vec_spec, vec_spec],
        out_specs=pl.BlockSpec((None, O, R), lambda n, h: (n, 0, h)),
        scratch_shapes=acc_scratch,
        compiler_params=pltpu.CompilerParams(
            dimension_semantics=("parallel", "parallel"),
            vmem_limit_bytes=vmem_limit),
        cost_estimate=pl.CostEstimate(flops=flops, transcendentals=0,
                                      bytes_accessed=in_bytes + N * HW * O * 4),
    )(s2d, s2d, w2, scale, shift)

    # NCHW without any transpose: (N, O, H_out*W_out) -> (N, O, H_out, W_out).
    return out_flat.reshape(N, O, H_out, W_out)


def _reference(x, w, b, g, bt, factor=2):
    # pure-JAX reference of the PyTorch forward (training-mode BatchNorm)
    y = jax.lax.conv_general_dilated(
        x, w, (factor, factor), ((1, 1), (1, 1)),
        dimension_numbers=("NCHW", "OIHW", "NCHW"))
    y = y + b[None, :, None, None]
    m = y.mean(axis=(0, 2, 3), keepdims=True)
    v = ((y - m) ** 2).mean(axis=(0, 2, 3), keepdims=True)
    return (y - m) * jax.lax.rsqrt(v + _EPS) * g[None, :, None, None] \
        + bt[None, :, None, None]


if __name__ == "__main__":
    nfilters, factor = 4, 2
    out_ch = nfilters * factor            # DownSample: nfilters * factor channels
    N, C, H, W = 2, 4, 16, 16

    key = jax.random.PRNGKey(0)
    kx, kw, kb, kg, kbt = jax.random.split(key, 5)
    x = jax.random.normal(kx, (N, C, H, W), jnp.float32)
    weight = 0.1 * jax.random.normal(kw, (out_ch, C, 3, 3), jnp.float32)   # OIHW
    bias = 0.1 * jax.random.normal(kb, (out_ch,), jnp.float32)
    gamma = 1.0 + 0.1 * jax.random.normal(kg, (out_ch,), jnp.float32)
    beta = 0.1 * jax.random.normal(kbt, (out_ch,), jnp.float32)
    # TODO(synk): BatchNorm running-stat buffer updates (module side effects) are
    # not modeled; they do not affect the training-mode forward output.

    out = downsample(x, weight, bias, gamma, beta, factor=factor)
    out = jax.block_until_ready(out)

    ref = _reference(x, weight, bias, gamma, beta, factor)
    assert out.shape == (N, out_ch, H // factor, W // factor)
    err = float(jnp.max(jnp.abs(out - ref)))
    # bf16 MXU operands (f32 accumulation) -> looser tolerance than a pure-f32 path
    assert jnp.allclose(out, ref, atol=2e-2, rtol=2e-2), err
    print("KERNEL_OK")
</pallas_src>

<mosaic_0001>
module attributes {stable_mosaic.version = 11 : i64} {
  func.func @_stats_kernel(%arg0: i32, %arg1: i32, %arg2: memref<1x8x9x16xbf16, #tpu.memory_space<vmem>>, %arg3: memref<1x1x9x16xbf16, #tpu.memory_space<vmem>>, %arg4: memref<4x16x128xbf16, #tpu.memory_space<vmem>>, %arg5: memref<1x1x128xf32, #tpu.memory_space<vmem>>, %arg6: memref<1x1x128xf32, #tpu.memory_space<vmem>>, %arg7: memref<64x128xf32, #tpu.memory_space<vmem>>) attributes {dimension_semantics = [#tpu.dimension_semantics<parallel>, #tpu.dimension_semantics<arbitrary>], iteration_bounds = array<i64: 2, 1>, scalar_prefetch = 0 : i64, scratch_operands = 1 : i64, tpu.core_type = #tpu.core_type<tc>, window_params = [{transform_indices = @transform_0, window_bounds = array<i64: 1, 8, 9, 16>}, {transform_indices = @transform_1, window_bounds = array<i64: 1, 1, 9, 16>}, {pipeline_mode = #tpu.pipeline_mode<synchronous>, transform_indices = @transform_2, window_bounds = array<i64: 4, 16, 128>}, {transform_indices = @transform_3, window_bounds = array<i64: 1, 1, 128>}, {transform_indices = @transform_4, window_bounds = array<i64: 1, 1, 128>}]} {
    %c0_i32 = arith.constant 0 : i32
    %0 = arith.cmpi eq, %arg1, %c0_i32 : i32
    %1 = arith.extui %0 : i1 to i32
    %c0_i32_0 = arith.constant 0 : i32
    %2 = arith.cmpi ne, %1, %c0_i32_0 : i32
    scf.if %2 {
      %cst_69 = arith.constant 0.000000e+00 : f32
      %65 = vector.broadcast %cst_69 : f32 to vector<1x128xf32>
      %c0_70 = arith.constant 0 : index
      %c0_71 = arith.constant 0 : index
      %c0_72 = arith.constant 0 : index
      %66 = vector.load %arg5[%c0_70, %c0_71, %c0_72] : memref<1x1x128xf32, #tpu.memory_space<vmem>>, vector<1x1x128xf32>
      %67 = vector.shape_cast %66 : vector<1x1x128xf32> to vector<1x128xf32>
      %68 = vector.shape_cast %65 : vector<1x128xf32> to vector<1x1x128xf32>
      tpu.vector_store %arg5[%c0_70, %c0_71, %c0_72], %68 {strides = array<i32>} : memref<1x1x128xf32, #tpu.memory_space<vmem>>, vector<1x1x128xf32>,
      %cst_73 = arith.constant 0.000000e+00 : f32
      %69 = vector.broadcast %cst_73 : f32 to vector<1x128xf32>
      %c0_74 = arith.constant 0 : index
      %c0_75 = arith.constant 0 : index
      %c0_76 = arith.constant 0 : index
      %70 = vector.load %arg6[%c0_74, %c0_75, %c0_76] : memref<1x1x128xf32, #tpu.memory_space<vmem>>, vector<1x1x128xf32>
      %71 = vector.shape_cast %70 : vector<1x1x128xf32> to vector<1x128xf32>
      %72 = vector.shape_cast %69 : vector<1x128xf32> to vector<1x1x128xf32>
      tpu.vector_store %arg6[%c0_74, %c0_75, %c0_76], %72 {strides = array<i32>} : memref<1x1x128xf32, #tpu.memory_space<vmem>>, vector<1x1x128xf32>,
    } else {
    }
    %c0 = arith.constant 0 : index
    %c0_1 = arith.constant 0 : index
    %c0_2 = arith.constant 0 : index
    %c0_3 = arith.constant 0 : index
    %3 = vector.load %arg2[%c0, %c0_1, %c0_2, %c0_3] : memref<1x8x9x16xbf16, #tpu.memory_space<vmem>>, vector<1x8x8x16xbf16>
    %4 = vector.shape_cast %3 : vector<1x8x8x16xbf16> to vector<8x8x16xbf16>
    %5 = vector.shape_cast %4 : vector<8x8x16xbf16> to vector<64x16xbf16>
    %c0_4 = arith.constant 0 : index
    %c0_5 = arith.constant 0 : index
    %c0_6 = arith.constant 0 : index
    %6 = vector.load %arg4[%c0_4, %c0_5, %c0_6] : memref<4x16x128xbf16, #tpu.memory_space<vmem>>, vector<1x16x128xbf16>
    %7 = vector.shape_cast %6 : vector<1x16x128xbf16> to vector<16x128xbf16>
    %cst = arith.constant dense<0.000000e+00> : vector<64x128xf32>
    %8 = tpu.matmul %5, %7, %cst {dimension_numbers = #tpu.dot_dimension_numbers<[1], [0], [0], [1], [0, 0, 1, 1], [], []>} : vector<64x16xbf16>, vector<16x128xbf16>, vector<64x128xf32> -> vector<64x128xf32>
    %c0_7 = arith.constant 0 : index
    %c0_8 = arith.constant 0 : index
    %c1 = arith.constant 1 : index
    %c0_9 = arith.constant 0 : index
    %9 = vector.load %arg2[%c0_7, %c0_8, %c1, %c0_9] : memref<1x8x9x16xbf16, #tpu.memory_space<vmem>>, vector<1x8x8x16xbf16>
    %10 = vector.shape_cast %9 : vector<1x8x8x16xbf16> to vector<8x8x16xbf16>
    %11 = vector.shape_cast %10 : vector<8x8x16xbf16> to vector<64x16xbf16>
    %c1_10 = arith.constant 1 : index
    %c0_11 = arith.constant 0 : index
    %c0_12 = arith.constant 0 : index
    %12 = vector.load %arg4[%c1_10, %c0_11, %c0_12] : memref<4x16x128xbf16, #tpu.memory_space<vmem>>, vector<1x16x128xbf16>
    %13 = vector.shape_cast %12 : vector<1x16x128xbf16> to vector<16x128xbf16>
    %cst_13 = arith.constant dense<0.000000e+00> : vector<64x128xf32>
    %14 = tpu.matmul %11, %13, %cst_13 {dimension_numbers = #tpu.dot_dimension_numbers<[1], [0], [0], [1], [0, 0, 1, 1], [], []>} : vector<64x16xbf16>, vector<16x128xbf16>, vector<64x128xf32> -> vector<64x128xf32>
    %15 = arith.addf %8, %14 : vector<64x128xf32>
    %c0_14 = arith.constant 0 : index
    %c0_15 = arith.constant 0 : index
    %16 = vector.load %arg7[%c0_14, %c0_15] : memref<64x128xf32, #tpu.memory_space<vmem>>, vector<64x128xf32>
    tpu.vector_store %arg7[%c0_14, %c0_15], %15 {strides = array<i32>} : memref<64x128xf32, #tpu.memory_space<vmem>>, vector<64x128xf32>,
    %c0_16 = arith.constant 0 : index
    %c0_17 = arith.constant 0 : index
    %17 = vector.load %arg7[%c0_16, %c0_17] : memref<64x128xf32, #tpu.memory_space<vmem>>, vector<56x128xf32>
    %c0_18 = arith.constant 0 : index
    %c1_19 = arith.constant 1 : index
    %c0_20 = arith.constant 0 : index
    %c0_21 = arith.constant 0 : index
    %18 = vector.load %arg2[%c0_18, %c1_19, %c0_20, %c0_21] : memref<1x8x9x16xbf16, #tpu.memory_space<vmem>>, vector<1x7x8x16xbf16>
    %19 = vector.shape_cast %18 : vector<1x7x8x16xbf16> to vector<7x8x16xbf16>
    %20 = vector.shape_cast %19 : vector<7x8x16xbf16> to vector<56x16xbf16>
    %c2 = arith.constant 2 : index
    %c0_22 = arith.constant 0 : index
    %c0_23 = arith.constant 0 : index
    %21 = vector.load %arg4[%c2, %c0_22, %c0_23] : memref<4x16x128xbf16, #tpu.memory_space<vmem>>, vector<1x16x128xbf16>
    %22 = vector.shape_cast %21 : vector<1x16x128xbf16> to vector<16x128xbf16>
    %cst_24 = arith.constant dense<0.000000e+00> : vector<56x128xf32>
    %23 = tpu.matmul %20, %22, %cst_24 {dimension_numbers = #tpu.dot_dimension_numbers<[1], [0], [0], [1], [0, 0, 1, 1], [], []>} : vector<56x16xbf16>, vector<16x128xbf16>, vector<56x128xf32> -> vector<56x128xf32>
    %c0_25 = arith.constant 0 : index
    %c1_26 = arith.constant 1 : index
    %c1_27 = arith.constant 1 : index
    %c0_28 = arith.constant 0 : index
    %24 = vector.load %arg2[%c0_25, %c1_26, %c1_27, %c0_28] : memref<1x8x9x16xbf16, #tpu.memory_space<vmem>>, vector<1x7x8x16xbf16>
    %25 = vector.shape_cast %24 : vector<1x7x8x16xbf16> to vector<7x8x16xbf16>
    %26 = vector.shape_cast %25 : vector<7x8x16xbf16> to vector<56x16xbf16>
    %c3 = arith.constant 3 : index
    %c0_29 = arith.constant 0 : index
    %c0_30 = arith.constant 0 : index
    %27 = vector.load %arg4[%c3, %c0_29, %c0_30] : memref<4x16x128xbf16, #tpu.memory_space<vmem>>, vector<1x16x128xbf16>
    %28 = vector.shape_cast %27 : vector<1x16x128xbf16> to vector<16x128xbf16>
    %cst_31 = arith.constant dense<0.000000e+00> : vector<56x128xf32>
    %29 = tpu.matmul %26, %28, %cst_31 {dimension_numbers = #tpu.dot_dimension_numbers<[1], [0], [0], [1], [0, 0, 1, 1], [], []>} : vector<56x16xbf16>, vector<16x128xbf16>, vector<56x128xf32> -> vector<56x128xf32>
    %30 = arith.addf %23, %29 : vector<56x128xf32>
    %31 = arith.addf %17, %30 : vector<56x128xf32>
    %c0_32 = arith.constant 0 : index
    %c0_33 = arith.constant 0 : index
    %32 = vector.load %arg7[%c0_32, %c0_33] : memref<64x128xf32, #tpu.memory_space<vmem>>, vector<56x128xf32>
    tpu.vector_store %arg7[%c0_32, %c0_33], %31 {strides = array<i32>} : memref<64x128xf32, #tpu.memory_space<vmem>>, vector<56x128xf32>,
    %c56 = arith.constant 56 : index
    %c0_34 = arith.constant 0 : index
    %33 = vector.load %arg7[%c56, %c0_34] : memref<64x128xf32, #tpu.memory_space<vmem>>, vector<8x128xf32>
    %c0_35 = arith.constant 0 : index
    %c0_36 = arith.constant 0 : index
    %c0_37 = arith.constant 0 : index
    %c0_38 = arith.constant 0 : index
    %34 = vector.load %arg3[%c0_35, %c0_36, %c0_37, %c0_38] : memref<1x1x9x16xbf16, #tpu.memory_space<vmem>>, vector<1x1x8x16xbf16>
    %35 = vector.shape_cast %34 : vector<1x1x8x16xbf16> to vector<8x16xbf16>
    %c2_39 = arith.constant 2 : index
    %c0_40 = arith.constant 0 : index
    %c0_41 = arith.constant 0 : index
    %36 = vector.load %arg4[%c2_39, %c0_40, %c0_41] : memref<4x16x128xbf16, #tpu.memory_space<vmem>>, vector<1x16x128xbf16>
    %37 = vector.shape_cast %36 : vector<1x16x128xbf16> to vector<16x128xbf16>
    %cst_42 = arith.constant dense<0.000000e+00> : vector<8x128xf32>
    %38 = tpu.matmul %35, %37, %cst_42 {dimension_numbers = #tpu.dot_dimension_numbers<[1], [0], [0], [1], [0, 0, 1, 1], [], []>} : vector<8x16xbf16>, vector<16x128xbf16>, vector<8x128xf32> -> vector<8x128xf32>
    %c0_43 = arith.constant 0 : index
    %c0_44 = arith.constant 0 : index
    %c1_45 = arith.constant 1 : index
    %c0_46 = arith.constant 0 : index
    %39 = vector.load %arg3[%c0_43, %c0_44, %c1_45, %c0_46] : memref<1x1x9x16xbf16, #tpu.memory_space<vmem>>, vector<1x1x8x16xbf16>
    %40 = vector.shape_cast %39 : vector<1x1x8x16xbf16> to vector<8x16xbf16>
    %c3_47 = arith.constant 3 : index
    %c0_48 = arith.constant 0 : index
    %c0_49 = arith.constant 0 : index
    %41 = vector.load %arg4[%c3_47, %c0_48, %c0_49] : memref<4x16x128xbf16, #tpu.memory_space<vmem>>, vector<1x16x128xbf16>
    %42 = vector.shape_cast %41 : vector<1x16x128xbf16> to vector<16x128xbf16>
    %cst_50 = arith.constant dense<0.000000e+00> : vector<8x128xf32>
    %43 = tpu.matmul %40, %42, %cst_50 {dimension_numbers = #tpu.dot_dimension_numbers<[1], [0], [0], [1], [0, 0, 1, 1], [], []>} : vector<8x16xbf16>, vector<16x128xbf16>, vector<8x128xf32> -> vector<8x128xf32>
    %44 = arith.addf %38, %43 : vector<8x128xf32>
    %45 = arith.addf %33, %44 : vector<8x128xf32>
    %c56_51 = arith.constant 56 : index
    %c0_52 = arith.constant 0 : index
    %46 = vector.load %arg7[%c56_51, %c0_52] : memref<64x128xf32, #tpu.memory_space<vmem>>, vector<8x128xf32>
    tpu.vector_store %arg7[%c56_51, %c0_52], %45 {strides = array<i32>} : memref<64x128xf32, #tpu.memory_space<vmem>>, vector<8x128xf32>,
    %c0_53 = arith.constant 0 : index
    %c0_54 = arith.constant 0 : index
    %47 = vector.load %arg7[%c0_53, %c0_54] : memref<64x128xf32, #tpu.memory_space<vmem>>, vector<64x128xf32>
    %c0_55 = arith.constant 0 : index
    %c0_56 = arith.constant 0 : index
    %c0_57 = arith.constant 0 : index
    %48 = vector.load %arg5[%c0_55, %c0_56, %c0_57] : memref<1x1x128xf32, #tpu.memory_space<vmem>>, vector<1x1x128xf32>
    %49 = vector.shape_cast %48 : vector<1x1x128xf32> to vector<1x128xf32>
    %cst_58 = arith.constant dense<0.000000e+00> : vector<128xf32>
    %50 = vector.multi_reduction <add>, %47, %cst_58 [0] : vector<64x128xf32> to vector<128xf32>
    %51 = vector.shape_cast %50 : vector<128xf32> to vector<1x128xf32>
    %52 = arith.addf %49, %51 : vector<1x128xf32>
    %c0_59 = arith.constant 0 : index
    %c0_60 = arith.constant 0 : index
    %c0_61 = arith.constant 0 : index
    %53 = vector.load %arg5[%c0_59, %c0_60, %c0_61] : memref<1x1x128xf32, #tpu.memory_space<vmem>>, vector<1x1x128xf32>
    %54 = vector.shape_cast %53 : vector<1x1x128xf32> to vector<1x128xf32>
    %55 = vector.shape_cast %52 : vector<1x128xf32> to vector<1x1x128xf32>
    tpu.vector_store %arg5[%c0_59, %c0_60, %c0_61], %55 {strides = array<i32>} : memref<1x1x128xf32, #tpu.memory_space<vmem>>, vector<1x1x128xf32>,
    %c0_62 = arith.constant 0 : index
    %c0_63 = arith.constant 0 : index
    %c0_64 = arith.constant 0 : index
    %56 = vector.load %arg6[%c0_62, %c0_63, %c0_64] : memref<1x1x128xf32, #tpu.memory_space<vmem>>, vector<1x1x128xf32>
    %57 = vector.shape_cast %56 : vector<1x1x128xf32> to vector<1x128xf32>
    %58 = arith.mulf %47, %47 : vector<64x128xf32>
    %cst_65 = arith.constant dense<0.000000e+00> : vector<128xf32>
    %59 = vector.multi_reduction <add>, %58, %cst_65 [0] : vector<64x128xf32> to vector<128xf32>
    %60 = vector.shape_cast %59 : vector<128xf32> to vector<1x128xf32>
    %61 = arith.addf %57, %60 : vector<1x128xf32>
    %c0_66 = arith.constant 0 : index
    %c0_67 = arith.constant 0 : index
    %c0_68 = arith.constant 0 : index
    %62 = vector.load %arg6[%c0_66, %c0_67, %c0_68] : memref<1x1x128xf32, #tpu.memory_space<vmem>>, vector<1x1x128xf32>
    %63 = vector.shape_cast %62 : vector<1x1x128xf32> to vector<1x128xf32>
    %64 = vector.shape_cast %61 : vector<1x128xf32> to vector<1x1x128xf32>
    tpu.vector_store %arg6[%c0_66, %c0_67, %c0_68], %64 {strides = array<i32>} : memref<1x1x128xf32, #tpu.memory_space<vmem>>, vector<1x1x128xf32>,
    return
  }
  func.func @transform_0(%arg0: i32, %arg1: i32) -> (i32, i32, i32, i32) {
    %c0_i32 = arith.constant 0 : i32
    %c0_i32_0 = arith.constant 0 : i32
    %c0_i32_1 = arith.constant 0 : i32
    return %arg0, %arg1, %c0_i32, %c0_i32_0 : i32, i32, i32, i32
  }
  func.func @transform_1(%arg0: i32, %arg1: i32) -> (i32, i32, i32, i32) {
    %c1_i32 = arith.constant 1 : i32
    %0 = arith.addi %arg1, %c1_i32 : i32
    %c8_i32 = arith.constant 8 : i32
    %1 = arith.muli %0, %c8_i32 : i32
    %c0_i32 = arith.constant 0 : i32
    %c0_i32_0 = arith.constant 0 : i32
    %c0_i32_1 = arith.constant 0 : i32
    return %arg0, %1, %c0_i32, %c0_i32_0 : i32, i32, i32, i32
  }
  func.func @transform_2(%arg0: i32, %arg1: i32) -> (i32, i32, i32) {
    %c0_i32 = arith.constant 0 : i32
    %c0_i32_0 = arith.constant 0 : i32
    %c0_i32_1 = arith.constant 0 : i32
    %c0_i32_2 = arith.constant 0 : i32
    return %c0_i32, %c0_i32_0, %c0_i32_1 : i32, i32, i32
  }
  func.func @transform_3(%arg0: i32, %arg1: i32) -> (i32, i32, i32) {
    %c0_i32 = arith.constant 0 : i32
    %c0_i32_0 = arith.constant 0 : i32
    %c0_i32_1 = arith.constant 0 : i32
    return %arg0, %c0_i32, %c0_i32_0 : i32, i32, i32
  }
  func.func @transform_4(%arg0: i32, %arg1: i32) -> (i32, i32, i32) {
    %c0_i32 = arith.constant 0 : i32
    %c0_i32_0 = arith.constant 0 : i32
    %c0_i32_1 = arith.constant 0 : i32
    return %arg0, %c0_i32, %c0_i32_0 : i32, i32, i32
  }
}

module attributes {stable_mosaic.version = 11 : i64} {
  func.func @_apply_kernel(%arg0: i32, %arg1: i32, %arg2: memref<1x8x9x16xbf16, #tpu.memory_space<vmem>>, %arg3: memref<1x1x9x16xbf16, #tpu.memory_space<vmem>>, %arg4: memref<4x16x128xbf16, #tpu.memory_space<vmem>>, %arg5: memref<8x1xf32, #tpu.memory_space<vmem>>, %arg6: memref<8x1xf32, #tpu.memory_space<vmem>>, %arg7: memref<1x8x64xf32, #tpu.memory_space<vmem>>, %arg8: memref<64x128xf32, #tpu.memory_space<vmem>>) attributes {dimension_semantics = [#tpu.dimension_semantics<parallel>, #tpu.dimension_semantics<parallel>], iteration_bounds = array<i64: 2, 1>, scalar_prefetch = 0 : i64, scratch_operands = 1 : i64, tpu.core_type = #tpu.core_type<tc>, window_params = [{transform_indices = @transform_0, window_bounds = array<i64: 1, 8, 9, 16>}, {transform_indices = @transform_1, window_bounds = array<i64: 1, 1, 9, 16>}, {pipeline_mode = #tpu.pipeline_mode<synchronous>, transform_indices = @transform_2, window_bounds = array<i64: 4, 16, 128>}, {pipeline_mode = #tpu.pipeline_mode<synchronous>, transform_indices = @transform_3, window_bounds = array<i64: 8, 1>}, {pipeline_mode = #tpu.pipeline_mode<synchronous>, transform_indices = @transform_4, window_bounds = array<i64: 8, 1>}, {transform_indices = @transform_5, window_bounds = array<i64: 1, 8, 64>}]} {
    %c0 = arith.constant 0 : index
    %c0_0 = arith.constant 0 : index
    %c0_1 = arith.constant 0 : index
    %c0_2 = arith.constant 0 : index
    %0 = vector.load %arg2[%c0, %c0_0, %c0_1, %c0_2] : memref<1x8x9x16xbf16, #tpu.memory_space<vmem>>, vector<1x8x8x16xbf16>
    %1 = vector.shape_cast %0 : vector<1x8x8x16xbf16> to vector<8x8x16xbf16>
    %2 = vector.shape_cast %1 : vector<8x8x16xbf16> to vector<64x16xbf16>
    %c0_3 = arith.constant 0 : index
    %c0_4 = arith.constant 0 : index
    %c0_5 = arith.constant 0 : index
    %3 = vector.load %arg4[%c0_3, %c0_4, %c0_5] : memref<4x16x128xbf16, #tpu.memory_space<vmem>>, vector<1x16x128xbf16>
    %4 = vector.shape_cast %3 : vector<1x16x128xbf16> to vector<16x128xbf16>
    %cst = arith.constant dense<0.000000e+00> : vector<64x128xf32>
    %5 = tpu.matmul %2, %4, %cst {dimension_numbers = #tpu.dot_dimension_numbers<[1], [0], [0], [1], [0, 0, 1, 1], [], []>} : vector<64x16xbf16>, vector<16x128xbf16>, vector<64x128xf32> -> vector<64x128xf32>
    %c0_6 = arith.constant 0 : index
    %c0_7 = arith.constant 0 : index
    %c1 = arith.constant 1 : index
    %c0_8 = arith.constant 0 : index
    %6 = vector.load %arg2[%c0_6, %c0_7, %c1, %c0_8] : memref<1x8x9x16xbf16, #tpu.memory_space<vmem>>, vector<1x8x8x16xbf16>
    %7 = vector.shape_cast %6 : vector<1x8x8x16xbf16> to vector<8x8x16xbf16>
    %8 = vector.shape_cast %7 : vector<8x8x16xbf16> to vector<64x16xbf16>
    %c1_9 = arith.constant 1 : index
    %c0_10 = arith.constant 0 : index
    %c0_11 = arith.constant 0 : index
    %9 = vector.load %arg4[%c1_9, %c0_10, %c0_11] : memref<4x16x128xbf16, #tpu.memory_space<vmem>>, vector<1x16x128xbf16>
    %10 = vector.shape_cast %9 : vector<1x16x128xbf16> to vector<16x128xbf16>
    %cst_12 = arith.constant dense<0.000000e+00> : vector<64x128xf32>
    %11 = tpu.matmul %8, %10, %cst_12 {dimension_numbers = #tpu.dot_dimension_numbers<[1], [0], [0], [1], [0, 0, 1, 1], [], []>} : vector<64x16xbf16>, vector<16x128xbf16>, vector<64x128xf32> -> vector<64x128xf32>
    %12 = arith.addf %5, %11 : vector<64x128xf32>
    %c0_13 = arith.constant 0 : index
    %c0_14 = arith.constant 0 : index
    %13 = vector.load %arg8[%c0_13, %c0_14] : memref<64x128xf32, #tpu.memory_space<vmem>>, vector<64x128xf32>
    tpu.vector_store %arg8[%c0_13, %c0_14], %12 {strides = array<i32>} : memref<64x128xf32, #tpu.memory_space<vmem>>, vector<64x128xf32>,
    %c0_15 = arith.constant 0 : index
    %c0_16 = arith.constant 0 : index
    %14 = vector.load %arg8[%c0_15, %c0_16] : memref<64x128xf32, #tpu.memory_space<vmem>>, vector<56x128xf32>
    %c0_17 = arith.constant 0 : index
    %c1_18 = arith.constant 1 : index
    %c0_19 = arith.constant 0 : index
    %c0_20 = arith.constant 0 : index
    %15 = vector.load %arg2[%c0_17, %c1_18, %c0_19, %c0_20] : memref<1x8x9x16xbf16, #tpu.memory_space<vmem>>, vector<1x7x8x16xbf16>
    %16 = vector.shape_cast %15 : vector<1x7x8x16xbf16> to vector<7x8x16xbf16>
    %17 = vector.shape_cast %16 : vector<7x8x16xbf16> to vector<56x16xbf16>
    %c2 = arith.constant 2 : index
    %c0_21 = arith.constant 0 : index
    %c0_22 = arith.constant 0 : index
    %18 = vector.load %arg4[%c2, %c0_21, %c0_22] : memref<4x16x128xbf16, #tpu.memory_space<vmem>>, vector<1x16x128xbf16>
    %19 = vector.shape_cast %18 : vector<1x16x128xbf16> to vector<16x128xbf16>
    %cst_23 = arith.constant dense<0.000000e+00> : vector<56x128xf32>
    %20 = tpu.matmul %17, %19, %cst_23 {dimension_numbers = #tpu.dot_dimension_numbers<[1], [0], [0], [1], [0, 0, 1, 1], [], []>} : vector<56x16xbf16>, vector<16x128xbf16>, vector<56x128xf32> -> vector<56x128xf32>
    %c0_24 = arith.constant 0 : index
    %c1_25 = arith.constant 1 : index
    %c1_26 = arith.constant 1 : index
    %c0_27 = arith.constant 0 : index
    %21 = vector.load %arg2[%c0_24, %c1_25, %c1_26, %c0_27] : memref<1x8x9x16xbf16, #tpu.memory_space<vmem>>, vector<1x7x8x16xbf16>
    %22 = vector.shape_cast %21 : vector<1x7x8x16xbf16> to vector<7x8x16xbf16>
    %23 = vector.shape_cast %22 : vector<7x8x16xbf16> to vector<56x16xbf16>
    %c3 = arith.constant 3 : index
    %c0_28 = arith.constant 0 : index
    %c0_29 = arith.constant 0 : index
    %24 = vector.load %arg4[%c3, %c0_28, %c0_29] : memref<4x16x128xbf16, #tpu.memory_space<vmem>>, vector<1x16x128xbf16>
    %25 = vector.shape_cast %24 : vector<1x16x128xbf16> to vector<16x128xbf16>
    %cst_30 = arith.constant dense<0.000000e+00> : vector<56x128xf32>
    %26 = tpu.matmul %23, %25, %cst_30 {dimension_numbers = #tpu.dot_dimension_numbers<[1], [0], [0], [1], [0, 0, 1, 1], [], []>} : vector<56x16xbf16>, vector<16x128xbf16>, vector<56x128xf32> -> vector<56x128xf32>
    %27 = arith.addf %20, %26 : vector<56x128xf32>
    %28 = arith.addf %14, %27 : vector<56x128xf32>
    %c0_31 = arith.constant 0 : index
    %c0_32 = arith.constant 0 : index
    %29 = vector.load %arg8[%c0_31, %c0_32] : memref<64x128xf32, #tpu.memory_space<vmem>>, vector<56x128xf32>
    tpu.vector_store %arg8[%c0_31, %c0_32], %28 {strides = array<i32>} : memref<64x128xf32, #tpu.memory_space<vmem>>, vector<56x128xf32>,
    %c56 = arith.constant 56 : index
    %c0_33 = arith.constant 0 : index
    %30 = vector.load %arg8[%c56, %c0_33] : memref<64x128xf32, #tpu.memory_space<vmem>>, vector<8x128xf32>
    %c0_34 = arith.constant 0 : index
    %c0_35 = arith.constant 0 : index
    %c0_36 = arith.constant 0 : index
    %c0_37 = arith.constant 0 : index
    %31 = vector.load %arg3[%c0_34, %c0_35, %c0_36, %c0_37] : memref<1x1x9x16xbf16, #tpu.memory_space<vmem>>, vector<1x1x8x16xbf16>
    %32 = vector.shape_cast %31 : vector<1x1x8x16xbf16> to vector<8x16xbf16>
    %c2_38 = arith.constant 2 : index
    %c0_39 = arith.constant 0 : index
    %c0_40 = arith.constant 0 : index
    %33 = vector.load %arg4[%c2_38, %c0_39, %c0_40] : memref<4x16x128xbf16, #tpu.memory_space<vmem>>, vector<1x16x128xbf16>
    %34 = vector.shape_cast %33 : vector<1x16x128xbf16> to vector<16x128xbf16>
    %cst_41 = arith.constant dense<0.000000e+00> : vector<8x128xf32>
    %35 = tpu.matmul %32, %34, %cst_41 {dimension_numbers = #tpu.dot_dimension_numbers<[1], [0], [0], [1], [0, 0, 1, 1], [], []>} : vector<8x16xbf16>, vector<16x128xbf16>, vector<8x128xf32> -> vector<8x128xf32>
    %c0_42 = arith.constant 0 : index
    %c0_43 = arith.constant 0 : index
    %c1_44 = arith.constant 1 : index
    %c0_45 = arith.constant 0 : index
    %36 = vector.load %arg3[%c0_42, %c0_43, %c1_44, %c0_45] : memref<1x1x9x16xbf16, #tpu.memory_space<vmem>>, vector<1x1x8x16xbf16>
    %37 = vector.shape_cast %36 : vector<1x1x8x16xbf16> to vector<8x16xbf16>
    %c3_46 = arith.constant 3 : index
    %c0_47 = arith.constant 0 : index
    %c0_48 = arith.constant 0 : index
    %38 = vector.load %arg4[%c3_46, %c0_47, %c0_48] : memref<4x16x128xbf16, #tpu.memory_space<vmem>>, vector<1x16x128xbf16>
    %39 = vector.shape_cast %38 : vector<1x16x128xbf16> to vector<16x128xbf16>
    %cst_49 = arith.constant dense<0.000000e+00> : vector<8x128xf32>
    %40 = tpu.matmul %37, %39, %cst_49 {dimension_numbers = #tpu.dot_dimension_numbers<[1], [0], [0], [1], [0, 0, 1, 1], [], []>} : vector<8x16xbf16>, vector<16x128xbf16>, vector<8x128xf32> -> vector<8x128xf32>
    %41 = arith.addf %35, %40 : vector<8x128xf32>
    %42 = arith.addf %30, %41 : vector<8x128xf32>
    %c56_50 = arith.constant 56 : index
    %c0_51 = arith.constant 0 : index
    %43 = vector.load %arg8[%c56_50, %c0_51] : memref<64x128xf32, #tpu.memory_space<vmem>>, vector<8x128xf32>
    tpu.vector_store %arg8[%c56_50, %c0_51], %42 {strides = array<i32>} : memref<64x128xf32, #tpu.memory_space<vmem>>, vector<8x128xf32>,
    %c0_52 = arith.constant 0 : index
    %c0_53 = arith.constant 0 : index
    %44 = vector.load %arg8[%c0_52, %c0_53] : memref<64x128xf32, #tpu.memory_space<vmem>>, vector<64x128xf32>
    %45 = tpu.transpose %44, [1, 0] : vector<64x128xf32> -> vector<128x64xf32>
    %46 = vector.extract_strided_slice %45 {offsets = [0, 0], sizes = [8, 64], strides = [1, 1]} : vector<128x64xf32> to vector<8x64xf32>
    %c0_54 = arith.constant 0 : index
    %c0_55 = arith.constant 0 : index
    %47 = vector.load %arg5[%c0_54, %c0_55] : memref<8x1xf32, #tpu.memory_space<vmem>>, vector<8x1xf32>
    %48 = vector.broadcast %47 : vector<8x1xf32> to vector<8x64xf32>
    %49 = arith.mulf %46, %48 : vector<8x64xf32>
    %c0_56 = arith.constant 0 : index
    %c0_57 = arith.constant 0 : index
    %50 = vector.load %arg6[%c0_56, %c0_57] : memref<8x1xf32, #tpu.memory_space<vmem>>, vector<8x1xf32>
    %51 = vector.broadcast %50 : vector<8x1xf32> to vector<8x64xf32>
    %52 = arith.addf %49, %51 : vector<8x64xf32>
    %c0_58 = arith.constant 0 : index
    %c0_59 = arith.constant 0 : index
    %c0_60 = arith.constant 0 : index
    %53 = vector.load %arg7[%c0_58, %c0_59, %c0_60] : memref<1x8x64xf32, #tpu.memory_space<vmem>>, vector<1x8x64xf32>
    %54 = vector.shape_cast %53 : vector<1x8x64xf32> to vector<8x64xf32>
    %55 = vector.shape_cast %52 : vector<8x64xf32> to vector<1x8x64xf32>
    tpu.vector_store %arg7[%c0_58, %c0_59, %c0_60], %55 {strides = array<i32>} : memref<1x8x64xf32, #tpu.memory_space<vmem>>, vector<1x8x64xf32>,
    return
  }
  func.func @transform_0(%arg0: i32, %arg1: i32) -> (i32, i32, i32, i32) {
    %c0_i32 = arith.constant 0 : i32
    %c0_i32_0 = arith.constant 0 : i32
    %c0_i32_1 = arith.constant 0 : i32
    return %arg0, %arg1, %c0_i32, %c0_i32_0 : i32, i32, i32, i32
  }
  func.func @transform_1(%arg0: i32, %arg1: i32) -> (i32, i32, i32, i32) {
    %c1_i32 = arith.constant 1 : i32
    %0 = arith.addi %arg1, %c1_i32 : i32
    %c8_i32 = arith.constant 8 : i32
    %1 = arith.muli %0, %c8_i32 : i32
    %c0_i32 = arith.constant 0 : i32
    %c0_i32_0 = arith.constant 0 : i32
    %c0_i32_1 = arith.constant 0 : i32
    return %arg0, %1, %c0_i32, %c0_i32_0 : i32, i32, i32, i32
  }
  func.func @transform_2(%arg0: i32, %arg1: i32) -> (i32, i32, i32) {
    %c0_i32 = arith.constant 0 : i32
    %c0_i32_0 = arith.constant 0 : i32
    %c0_i32_1 = arith.constant 0 : i32
    %c0_i32_2 = arith.constant 0 : i32
    return %c0_i32, %c0_i32_0, %c0_i32_1 : i32, i32, i32
  }
  func.func @transform_3(%arg0: i32, %arg1: i32) -> (i32, i32) {
    %c0_i32 = arith.constant 0 : i32
    %c0_i32_0 = arith.constant 0 : i32
    %c0_i32_1 = arith.constant 0 : i32
    return %c0_i32, %c0_i32_0 : i32, i32
  }
  func.func @transform_4(%arg0: i32, %arg1: i32) -> (i32, i32) {
    %c0_i32 = arith.constant 0 : i32
    %c0_i32_0 = arith.constant 0 : i32
    %c0_i32_1 = arith.constant 0 : i32
    return %c0_i32, %c0_i32_0 : i32, i32
  }
  func.func @transform_5(%arg0: i32, %arg1: i32) -> (i32, i32, i32) {
    %c0_i32 = arith.constant 0 : i32
    %c0_i32_0 = arith.constant 0 : i32
    return %arg0, %c0_i32, %arg1 : i32, i32, i32
  }
}

</mosaic_0001>

<llo_original>
// kernel: downsample.3
$region0: #{downsample.3}
  #allocation0 [shape = 'u32[]', space=smem, size = 0x4, offset = 0x4, fixed_abs, tag = 'smem constant byte address 0x4 - core index']
  #allocation1 [shape = 'u32[144,128]{1,0:T(1,128)}', space=vmem, size = 0x12000, scoped, tag = 'internal scratch']
  #allocation2 [shape = 'f32[64,128]{1,0:T(8,128)}', space=vmem, size = 0x8000, scoped, tag = 'scratch operand']
  %s0 = inlined_call_operand.vmem [shape: bf16[2,9,9,16], index: 0, kind: input, shape index: {}, may-alias: {0,1}]
  %s1 = inlined_call_operand.vmem [shape: bf16[2,9,9,16], index: 1, kind: input, shape index: {}, may-alias: {0,1}]
  %s2 = inlined_call_operand.vmem [shape: bf16[4,16,128], index: 2, kind: input, shape index: {}]
  %s3 = inlined_call_operand.vmem [shape: f32[8,1], index: 3, kind: input, shape index: {}]
  %s4 = inlined_call_operand.vmem [shape: f32[8,1], index: 4, kind: input, shape index: {}]
  %s5 = inlined_call_operand.vmem [shape: f32[2,8,64], index: 5, kind: output, shape index: {}]
  %s6 = sld [smem:[#allocation0]]
  $region53: #{downsample.3} parent=0
    _
  %s8 = ssub.s32 1, %s6
  %s9 = scalar_select 0, %s8, %s6
  loop: start=0, step=1, limit=4
  $region2: #{downsample.3} parent=0 // loop_pre_header
    _
  $region3: #{downsample.3} parent=0 // loop_header
    %s11 = sphi 0, %s15
    %p12 = scmp.ge.s32.totalorder %s11, 4
    %s18 = sphi 0, %s30
    %s19 = sphi 0, %s26
    %s20 = sphi 0, %s18
    %s21 = sphi 0, %s19
    %s22 = sphi 0, %s20
    %s23 = sphi 0, %s21
    %s35 = sphi 0, %s37
    %s38 = sphi 0, %s35
    %s39 = sphi 0, %s38
    %s55 = sphi 0, %s39
    %s67 = sphi 0, %s69
    %s70 = sphi 0, %s67
    %s71 = sphi 0, %s70
    %s87 = sphi 0, %s71
    %s91 = sphi 0, %s91
    %s93 = sphi 0, %s91
    %s94 = sphi 0, %s93
    %s108 = sphi 0, %s94
    %s112 = sphi 0, %s112
    %s114 = sphi 0, %s112
    %s115 = sphi 0, %s114
    %s129 = sphi 0, %s115
    %s133 = sphi 0, %s133
    %s135 = sphi 0, %s133
    %s136 = sphi 0, %s135
    %s150 = sphi 0, %s136
    %s158 = sphi 0, %s160
    %s161 = sphi 0, %s158
    %s162 = sphi 0, %s161
    %s178 = sphi 0, %s162
  $region4: #{downsample.3} parent=0 // loop_header_branch
    %14 = sbr.rel (%p12) target = $region8
  $region5: #{downsample.3} parent=0 // loop_body
    %s16 = ssub.s32 %s11, 1
    %s17 = ssub.s32 %s11, 2
    %s24 = sadd.s32 1, %s19
    %p25 = scmp.ge.s32.totalorder %s24, 1
    %s26 = scalar_select %p25, 0, %s24
    %s27 = sadd.s32 1, %s18
    %s28 = scalar_select %p25, %s27, %s18
    %p29 = scmp.ge.s32.totalorder %s28, 2
    %s30 = scalar_select %p29, 0, %s28
    %s31 = ssub.s32 %s18, %s30
    %s32 = ssub.s32 %s19, %s26
    %s33 = sor.u32 %s31, %s32
    %p34 = scmp.eq.s32.totalorder %s33, 0
    %s36 = sadd.s32 %s35, 1
    %s37 = scalar_select %p34, %s35, %s36
    %p40 = pneg %p34
    %p41 = scmp.eq.s32.totalorder %s11, 1
    %p42 = por %p40, %p41
    %p43 = scmp.ne.s32.totalorder %s35, %s38
    %p44 = scmp.eq.s32.totalorder %s11, 0
    %p45 = por %p43, %p44
    %p46 = scmp.ne.s32.totalorder %s35, %s38
    %p47 = scmp.eq.s32.totalorder %s16, 1
    %p48 = por %p46, %p47
    %p49 = scmp.ne.s32.totalorder %s38, %s39
    %p50 = scmp.eq.s32.totalorder %s16, 0
    %p51 = por %p49, %p50
    %p52 = scmp.ne.s32.totalorder %s38, %s39
    %p53 = scmp.eq.s32.totalorder %s17, 1
    %p54 = por %p52, %p53
    %p56 = scmp.ne.s32.totalorder %s39, %s55
    %p57 = scmp.eq.s32.totalorder %s17, 0
    %p58 = por %p56, %p57
    %s59 = sadd.s32 %s19, 1
    %s60 = smul.u32 %s59, 8
    %s61 = sadd.s32 %s26, 1
    %s62 = smul.u32 %s61, 8
    %s63 = ssub.s32 %s18, %s30
    %s64 = ssub.s32 %s60, %s62
    %s65 = sor.u32 %s63, %s64
    %p66 = scmp.eq.s32.totalorder %s65, 0
    %s68 = sadd.s32 %s67, 1
    %s69 = scalar_select %p66, %s67, %s68
    %p72 = pneg %p66
    %p73 = scmp.eq.s32.totalorder %s11, 1
    %p74 = por %p72, %p73
    %p75 = scmp.ne.s32.totalorder %s67, %s70
    %p76 = scmp.eq.s32.totalorder %s11, 0
    %p77 = por %p75, %p76
    %p78 = scmp.ne.s32.totalorder %s67, %s70
    %p79 = scmp.eq.s32.totalorder %s16, 1
    %p80 = por %p78, %p79
    %p81 = scmp.ne.s32.totalorder %s70, %s71
    %p82 = scmp.eq.s32.totalorder %s16, 0
    %p83 = por %p81, %p82
    %p84 = scmp.ne.s32.totalorder %s70, %s71
    %p85 = scmp.eq.s32.totalorder %s17, 1
    %p86 = por %p84, %p85
    %p88 = scmp.ne.s32.totalorder %s71, %s87
    %p89 = scmp.eq.s32.totalorder %s17, 0
    %p90 = por %p88, %p89
    %s92 = sadd.s32 %s91, 1
    %p95 = scmp.eq.s32.totalorder %s11, 1
    %p96 = scmp.ne.s32.totalorder %s91, %s93
    %p97 = scmp.eq.s32.totalorder %s11, 0
    %p98 = por %p96, %p97
    %p99 = scmp.ne.s32.totalorder %s91, %s93
    %p100 = scmp.eq.s32.totalorder %s16, 1
    %p101 = por %p99, %p100
    %p102 = scmp.ne.s32.totalorder %s93, %s94
    %p103 = scmp.eq.s32.totalorder %s16, 0
    %p104 = por %p102, %p103
    %p105 = scmp.ne.s32.totalorder %s93, %s94
    %p106 = scmp.eq.s32.totalorder %s17, 1
    %p107 = por %p105, %p106
    %p109 = scmp.ne.s32.totalorder %s94, %s108
    %p110 = scmp.eq.s32.totalorder %s17, 0
    %p111 = por %p109, %p110
    %s113 = sadd.s32 %s112, 1
    %p116 = scmp.eq.s32.totalorder %s11, 1
    %p117 = scmp.ne.s32.totalorder %s112, %s114
    %p118 = scmp.eq.s32.totalorder %s11, 0
    %p119 = por %p117, %p118
    %p120 = scmp.ne.s32.totalorder %s112, %s114
    %p121 = scmp.eq.s32.totalorder %s16, 1
    %p122 = por %p120, %p121
    %p123 = scmp.ne.s32.totalorder %s114, %s115
    %p124 = scmp.eq.s32.totalorder %s16, 0
    %p125 = por %p123, %p124
    %p126 = scmp.ne.s32.totalorder %s114, %s115
    %p127 = scmp.eq.s32.totalorder %s17, 1
    %p128 = por %p126, %p127
    %p130 = scmp.ne.s32.totalorder %s115, %s129
    %p131 = scmp.eq.s32.totalorder %s17, 0
    %p132 = por %p130, %p131
    %s134 = sadd.s32 %s133, 1
    %p137 = scmp.eq.s32.totalorder %s11, 1
    %p138 = scmp.ne.s32.totalorder %s133, %s135
    %p139 = scmp.eq.s32.totalorder %s11, 0
    %p140 = por %p138, %p139
    %p141 = scmp.ne.s32.totalorder %s133, %s135
    %p142 = scmp.eq.s32.totalorder %s16, 1
    %p143 = por %p141, %p142
    %p144 = scmp.ne.s32.totalorder %s135, %s136
    %p145 = scmp.eq.s32.totalorder %s16, 0
    %p146 = por %p144, %p145
    %p147 = scmp.ne.s32.totalorder %s135, %s136
    %p148 = scmp.eq.s32.totalorder %s17, 1
    %p149 = por %p147, %p148
    %p151 = scmp.ne.s32.totalorder %s136, %s150
    %p152 = scmp.eq.s32.totalorder %s17, 0
    %p153 = por %p151, %p152
    %s154 = ssub.s32 %s18, %s30
    %s155 = ssub.s32 %s19, %s26
    %s156 = sor.u32 %s154, %s155
    %p157 = scmp.eq.s32.totalorder %s156, 0
    %s159 = sadd.s32 %s158, 1
    %s160 = scalar_select %p157, %s158, %s159
    %p163 = pneg %p157
    %p164 = scmp.eq.s32.totalorder %s11, 1
    %p165 = por %p163, %p164
    %p166 = scmp.ne.s32.totalorder %s158, %s161
    %p167 = scmp.eq.s32.totalorder %s11, 0
    %p168 = por %p166, %p167
    %p169 = scmp.ne.s32.totalorder %s158, %s161
    %p170 = scmp.eq.s32.totalorder %s16, 1
    %p171 = por %p169, %p170
    %p172 = scmp.ne.s32.totalorder %s161, %s162
    %p173 = scmp.eq.s32.totalorder %s16, 0
    %p174 = por %p172, %p173
    %p175 = scmp.ne.s32.totalorder %s161, %s162
    %p176 = scmp.eq.s32.totalorder %s17, 1
    %p177 = por %p175, %p176
    %p179 = scmp.ne.s32.totalorder %s162, %s178
    %p180 = scmp.eq.s32.totalorder %s17, 0
    %p181 = por %p179, %p180
    %p182 = scmp.le.s32.totalorder 1, %s11
    %p183 = scmp.lt.s32.totalorder %s11, 3
    %p184 = pnand %p182, %p183
    %p185 = pneg %p184
    // Predicated region
    $region9: #{downsample.3} parent=5 // pred_check
      _
    $region10: #{downsample.3} parent=5 // pred_check_branch
      %187 = sbr.rel (%p184) target = $region12
    $region11: #{downsample.3} parent=5 // pred_region
      %s188 = ssub.s32 %s11, 1
      // Predicated region
      $region13: #{downsample.3} parent=11 // pred_check
        %p189 = pneg %p104
      $region14: #{downsample.3} parent=11 // pred_check_branch
        %191 = sbr.rel (%p189) target = $region16
      $region15: #{downsample.3} parent=11 // pred_region
        _
      $region16: #{downsample.3} parent=11 // pred_fallthru
        _
      // Predicated region
      $region17: #{downsample.3} parent=11 // pred_check
        %p192 = pneg %p125
      $region18: #{downsample.3} parent=11 // pred_check_branch
        %194 = sbr.rel (%p192) target = $region20
      $region19: #{downsample.3} parent=11 // pred_region
        _
      $region20: #{downsample.3} parent=11 // pred_fallthru
        _
      // Predicated region
      $region21: #{downsample.3} parent=11 // pred_check
        %p195 = pneg %p146
      $region22: #{downsample.3} parent=11 // pred_check_branch
        %197 = sbr.rel (%p195) target = $region24
      $region23: #{downsample.3} parent=11 // pred_region
        _
      $region24: #{downsample.3} parent=11 // pred_fallthru
        _
    $region12: #{downsample.3} parent=5 // pred_fallthru
      _
    %p198 = scmp.lt.s32.totalorder %s11, 2
    // Predicated region
    $region25: #{downsample.3} parent=5 // pred_check
      %p199 = pneg %p198
    $region26: #{downsample.3} parent=5 // pred_check_branch
      %201 = sbr.rel (%p199) target = $region28
    $region27: #{downsample.3} parent=5 // pred_region
      // Predicated region
      $region29: #{downsample.3} parent=27 // pred_check
        %p202 = pneg %p45
      $region30: #{downsample.3} parent=27 // pred_check_branch
        %204 = sbr.rel (%p202) target = $region32
      $region31: #{downsample.3} parent=27 // pred_region
        %s205 = smul.u32 8, %s19
        %s206 = ssub.s32 9, %s205
        %p207 = scmp.lt.s32.totalorder %s206, 8
        %s208 = scalar_select %p207, %s206, 8
        %s209 = smul.u32 64, %s208
        %s210 = smul.u32 %s209, 2
        %p211 = scmp.lt.s32.totalorder %s18, 1
        %s212 = scalar_select %p211, %s18, 1
        %p213 = scmp.lt.s32.totalorder %s205, 8
        %s214 = scalar_select %p213, %s205, 8
        %s215 = smul.addr %s214, 2
        %s216 = smul.addr %s212, 18
        %s217 = sadd.s32 %s215, %s216
        %s218 = smul.addr %s217, 4
        %s219 = scalar_lea.vmem %s0, %s218
        %s220 = smul.u32 8, %s19
        %s221 = ssub.s32 9, %s220
        %p222 = scmp.lt.s32.totalorder %s221, 8
        %s223 = scalar_select %p222, %s221, 8
        %s224 = smul.u32 64, %s223
        %s225 = smul.u32 %s224, 2
      $region32: #{downsample.3} parent=27 // pred_fallthru
        _
      // Predicated region
      $region33: #{downsample.3} parent=27 // pred_check
        %p226 = pneg %p77
      $region34: #{downsample.3} parent=27 // pred_check_branch
        %228 = sbr.rel (%p226) target = $region36
      $region35: #{downsample.3} parent=27 // pred_region
        %s229 = sadd.s32 %s19, 1
        %s230 = smul.u32 %s229, 8
        %p231 = scmp.lt.s32.totalorder %s18, 1
        %s232 = scalar_select %p231, %s18, 1
        %p233 = scmp.lt.s32.totalorder %s230, 8
        %s234 = scalar_select %p233, %s230, 8
        %s235 = smul.addr %s234, 2
        %s236 = smul.addr %s232, 18
        %s237 = sadd.s32 %s235, %s236
        %s238 = smul.addr %s237, 4
        %s239 = scalar_lea.vmem %s1, %s238
        %s240 = sadd.s32 %s19, 1
        %s241 = smul.u32 %s240, 8
      $region36: #{downsample.3} parent=27 // pred_fallthru
        _
    $region28: #{downsample.3} parent=5 // pred_fallthru
      _
    %p242 = scmp.le.s32.totalorder 1, %s11
    %p243 = scmp.lt.s32.totalorder %s11, 3
    %p244 = pnand %p242, %p243
    %p245 = pneg %p244
    // Predicated region
    $region37: #{downsample.3} parent=5 // pred_check
      _
    $region38: #{downsample.3} parent=5 // pred_check_branch
      %247 = sbr.rel (%p244) target = $region40
    $region39: #{downsample.3} parent=5 // pred_region
      %s248 = ssub.s32 %s11, 1
      %s249 = smul.u32 8, %s21
      %s250 = ssub.s32 9, %s249
      %p251 = scmp.lt.s32.totalorder %s250, 8
      %s252 = scalar_select %p251, %s250, 8
      %s253 = smul.u32 64, %s252
      %s254 = smul.u32 %s253, 2
      %p255 = scmp.lt.s32.totalorder %s20, 1
      %s256 = scalar_select %p255, %s20, 1
      %p257 = scmp.lt.s32.totalorder %s249, 8
      %s258 = scalar_select %p257, %s249, 8
      %s259 = smul.addr %s258, 2
      %s260 = smul.addr %s256, 18
      %s261 = sadd.s32 %s259, %s260
      %s262 = smul.addr %s261, 4
      %s263 = scalar_lea.vmem %s0, %s262
      %p264 = pneg %p51
      %p265 = pneg %p48
      %s266 = sadd.s32 %s21, 1
      %s267 = smul.u32 %s266, 8
      %p268 = scmp.lt.s32.totalorder %s20, 1
      %s269 = scalar_select %p268, %s20, 1
      %p270 = scmp.lt.s32.totalorder %s267, 8
      %s271 = scalar_select %p270, %s267, 8
      %s272 = smul.addr %s271, 2
      %s273 = smul.addr %s269, 18
      %s274 = sadd.s32 %s272, %s273
      %s275 = smul.addr %s274, 4
      %s276 = scalar_lea.vmem %s1, %s275
      %p277 = pneg %p83
      %p278 = pneg %p80
      %p279 = pneg %p104
      %p280 = pneg %p101
      %p281 = pneg %p125
      %p282 = pneg %p122
      %p283 = pneg %p146
      %p284 = pneg %p143
      %p285 = pneg %p174
      %p286 = pneg %p171
      %p287 = scmp.lt.s32.totalorder %s20, 1
      %s288 = scalar_select %p287, %s20, 1
      %p289 = scmp.lt.s32.totalorder %s21, 0
      %s290 = scalar_select %p289, %s21, 0
      %s291 = sadd.s32 %s290, %s288
      %s292 = smul.addr %s291, 8
      %s293 = scalar_lea.vmem %s5, %s292
      %s294 = smul.u32 8, %s21
      %s295 = ssub.s32 9, %s294
      %p296 = scmp.lt.s32.totalorder %s295, 8
      %s297 = scalar_select %p296, %s295, 8
      %s298 = smul.u32 64, %s297
      %s299 = smul.u32 %s298, 2
      %p300 = scmp.lt.s32.totalorder %s20, 1
      %s301 = scalar_select %p300, %s20, 1
      %p302 = scmp.lt.s32.totalorder %s294, 8
      %s303 = scalar_select %p302, %s294, 8
      %s304 = smul.addr %s303, 2
      %s305 = smul.addr %s301, 18
      %s306 = sadd.s32 %s304, %s305
      %s307 = smul.addr %s306, 4
      %s308 = scalar_lea.vmem %s0, %s307
      %s309 = smul.u32 8, %s21
      %s310 = ssub.s32 9, %s309
      %p311 = scmp.lt.s32.totalorder %s310, 8
      %s312 = scalar_select %p311, %s310, 8
      %s313 = smul.u32 64, %s312
      %s314 = smul.u32 %s313, 2
      %s315 = sadd.s32 %s21, 1
      %s316 = smul.u32 %s315, 8
      %p317 = scmp.lt.s32.totalorder %s20, 1
      %s318 = scalar_select %p317, %s20, 1
      %p319 = scmp.lt.s32.totalorder %s316, 8
      %s320 = scalar_select %p319, %s316, 8
      %s321 = smul.addr %s320, 2
      %s322 = smul.addr %s318, 18
      %s323 = sadd.s32 %s321, %s322
      %s324 = smul.addr %s323, 4
      %s325 = scalar_lea.vmem %s1, %s324
      %s326 = sadd.s32 %s21, 1
      %s327 = smul.u32 %s326, 8
      %p328 = scmp.lt.s32.totalorder %s20, 1
      %s329 = scalar_select %p328, %s20, 1
      %p330 = scmp.lt.s32.totalorder %s21, 0
      %s331 = scalar_select %p330, %s21, 0
      %s332 = sadd.s32 %s331, %s329
      %s333 = smul.addr %s332, 8
      %s334 = scalar_lea.vmem %s5, %s333
      %v336 = vld [vmem:[%s308] sm:$0xf]
      %v337 = vld [vmem:[%s308 + $0x8] sm:$0xf]
      %v338 = vld [vmem:[%s308 + $0x10] sm:$0xf]
      %v339 = vld [vmem:[%s308 + $0x18] sm:$0xf]
      %v340 = vld [vmem:[%s308 + $0x20] sm:$0xf]
      %v341 = vld [vmem:[%s308 + $0x28] sm:$0xf]
      %v342 = vld [vmem:[%s308 + $0x30] sm:$0xf]
      %v343 = vld [vmem:[%s308 + $0x38] sm:$0xf]
      %v344 = vld [vmem:[%s2] sm:$0xf]
      %v345 = vld [vmem:[%s2 + $0x4] sm:$0xf]
      %v346 = vld [vmem:[%s308 + $0x4] sm:$0x1]
      %v347 = vld [vmem:[%s308 + $0xc] sm:$0x1]
      %v348 = vld [vmem:[%s308 + $0x14] sm:$0x1]
      %v349 = vld [vmem:[%s308 + $0x1c] sm:$0x1]
      %v350 = vld [vmem:[%s308 + $0x24] sm:$0x1]
      %v351 = vld [vmem:[%s308 + $0x2c] sm:$0x1]
      %v352 = vld [vmem:[%s308 + $0x34] sm:$0x1]
      %v353 = vld [vmem:[%s308 + $0x3c] sm:$0x1]
      %vm354 = vsmask.f32 3328
      %vm355 = vsmask.f32 7440
      %vm356 = vmor %vm354, %vm355
      %v358 = vshrl.u32 %v336, 16
      %v360 = vrot.slane %v358, 4
      %v361 = vshll.u32 %v336, 16
      %v363 = vrot.slane %v361, 5
      %v364 = vor.u32 %v360, %v363
      %v365 = vrot.slane %v364, 4
      %v367 = vshll.u32 %v346, 16
      %v369 = vrot.slane %v367, 5
      %v370 = vsel %vm356, %v365, %v369
      %v372 = vshrl.u32 %v337, 16
      %v374 = vrot.slane %v372, 4
      %v375 = vshll.u32 %v337, 16
      %v377 = vrot.slane %v375, 5
      %v378 = vor.u32 %v374, %v377
      %v379 = vrot.slane %v378, 4
      %v381 = vshll.u32 %v347, 16
      %v383 = vrot.slane %v381, 5
      %v384 = vsel %vm356, %v379, %v383
      %v386 = vshrl.u32 %v338, 16
      %v388 = vrot.slane %v386, 4
      %v389 = vshll.u32 %v338, 16
      %v391 = vrot.slane %v389, 5
      %v392 = vor.u32 %v388, %v391
      %v393 = vrot.slane %v392, 4
      %v395 = vshll.u32 %v348, 16
      %v397 = vrot.slane %v395, 5
      %v398 = vsel %vm356, %v393, %v397
      %v400 = vshrl.u32 %v339, 16
      %v402 = vrot.slane %v400, 4
      %v403 = vshll.u32 %v339, 16
      %v405 = vrot.slane %v403, 5
      %v406 = vor.u32 %v402, %v405
      %v407 = vrot.slane %v406, 4
      %v409 = vshll.u32 %v349, 16
      %v411 = vrot.slane %v409, 5
      %v412 = vsel %vm356, %v407, %v411
      %v414 = vshrl.u32 %v340, 16
      %v416 = vrot.slane %v414, 4
      %v417 = vshll.u32 %v340, 16
      %v419 = vrot.slane %v417, 5
      %v420 = vor.u32 %v416, %v419
      %v421 = vrot.slane %v420, 4
      %v423 = vshll.u32 %v350, 16
      %v425 = vrot.slane %v423, 5
      %v426 = vsel %vm356, %v421, %v425
      %v428 = vshrl.u32 %v341, 16
      %v430 = vrot.slane %v428, 4
      %v431 = vshll.u32 %v341, 16
      %v433 = vrot.slane %v431, 5
      %v434 = vor.u32 %v430, %v433
      %v435 = vrot.slane %v434, 4
      %v437 = vshll.u32 %v351, 16
      %v439 = vrot.slane %v437, 5
      %v440 = vsel %vm356, %v435, %v439
      %v442 = vshrl.u32 %v342, 16
      %v444 = vrot.slane %v442, 4
      %v445 = vshll.u32 %v342, 16
      %v447 = vrot.slane %v445, 5
      %v448 = vor.u32 %v444, %v447
      %v449 = vrot.slane %v448, 4
      %v451 = vshll.u32 %v352, 16
      %v453 = vrot.slane %v451, 5
      %v454 = vsel %vm356, %v449, %v453
      %v456 = vshrl.u32 %v343, 16
      %v458 = vrot.slane %v456, 4
      %v459 = vshll.u32 %v343, 16
      %v461 = vrot.slane %v459, 5
      %v462 = vor.u32 %v458, %v461
      %v463 = vrot.slane %v462, 4
      %v465 = vshll.u32 %v353, 16
      %v467 = vrot.slane %v465, 5
      %v468 = vsel %vm356, %v463, %v467
      %s469 = scalar_lea.vmem %s2, 8
      %v470 = vld [vmem:[%s469] sm:$0xf]
      %v471 = vld [vmem:[%s469 + $0x4] sm:$0xf]
      %v472 = vunpack.c.l.b16 %v370
      %v473 = vunpack.c.l.b16 %v384
      %v474 = vunpack.c.l.b16 %v398
      %v475 = vunpack.c.l.b16 %v412
      %v476 = vunpack.c.l.b16 %v426
      %v477 = vunpack.c.l.b16 %v440
      %v478 = vunpack.c.l.b16 %v454
      %v479 = vunpack.c.l.b16 %v468
      %v480 = vpack.c.b16 %v473, %v472
      %v481 = vpack.c.b16 %v475, %v474
      %v482 = vpack.c.b16 %v477, %v476
      %v483 = vpack.c.b16 %v479, %v478
      %v486 = vunpack.c.l.b16 %v470
      %v487 = vunpack.c.l.b16 %v471
      %v488 = vpack.c.b16 %v487, %v486
      %vm490 = vcmask 130048
      %v492 = vsel %vm490, %v480, 0
      %v495 = vsel %vm490, %v481, 0
      %v498 = vsel %vm490, %v482, 0
      %v501 = vsel %vm490, %v483, 0
      %503 = vmatprep.subr.bf16.mxu0 0
      %504 = vmatpush1.bf16.msra.mxu0 0
      %505 = vmatprep.subr.bf16.mxu0 0
      %506 = vmatpush1.bf16.msra.mxu0 0
      %507 = vmatprep.subr.bf16.mxu0 0
      %508 = vmatpush1.bf16.msra.mxu0 0
      %509 = vmatprep.subr.bf16.mxu0 0
      %510 = vmatpush1.bf16.msra.mxu0 0
      %511 = vmatprep.subr.bf16.mxu0 0
      %512 = vmatpush1.bf16.msra.mxu0 0
      %513 = vmatprep.subr.bf16.mxu0 0
      %514 = vmatpush1.bf16.msra.mxu0 0
      %515 = vmatprep.subr.bf16.mxu0 0
      %516 = vmatpush1.bf16.msra.mxu0 0
      %517 = vmatprep.subr.bf16.mxu0 0
      %518 = vmatpush1.bf16.msra.mxu0 %v488
      %519 = vmatprep.subr.bf16.mxu0 0
      %520 = vmatpush2.bf16.msra.mxu0 0
      %521 = vmatprep.subr.bf16.mxu0 0
      %522 = vmatpush2.bf16.msra.mxu0 0
      %523 = vmatprep.subr.bf16.mxu0 0
      %524 = vmatpush2.bf16.msra.mxu0 0
      %525 = vmatprep.subr.bf16.mxu0 0
      %526 = vmatpush2.bf16.msra.mxu0 0
      %527 = vmatprep.subr.bf16.mxu0 0
      %528 = vmatpush2.bf16.msra.mxu0 0
      %529 = vmatprep.subr.bf16.mxu0 0
      %530 = vmatpush2.bf16.msra.mxu0 0
      %531 = vmatprep.subr.bf16.mxu0 0
      %532 = vmatpush2.bf16.msra.mxu0 0
      %533 = vmatprep.subr.bf16.mxu0 0
      %534 = vmatpush2.bf16.msra.mxu0 0
      %535 = vmatprep.mubr.bf16.mxu0 0
      %536 = vmatmul.mubr.bf16.gmra.mxu0 %v492
      %v537 = vpop.f32.mrf.mxu0
      %v538 = vadd.f32 0.0, %v537
      %v539 = vpop.f32.mrf.mxu0
      %v540 = vpop.f32.mrf.mxu0
      %v541 = vadd.f32 0.0, %v540
      %v542 = vpop.f32.mrf.mxu0
      %543 = vmatprep.mubr.bf16.mxu0 0
      %544 = vmatmul.mubr.bf16.gmra.mxu0 %v495
      %v545 = vpop.f32.mrf.mxu0
      %v546 = vadd.f32 0.0, %v545
      %v547 = vpop.f32.mrf.mxu0
      %v548 = vpop.f32.mrf.mxu0
      %v549 = vadd.f32 0.0, %v548
      %v550 = vpop.f32.mrf.mxu0
      %551 = vmatprep.mubr.bf16.mxu0 0
      %552 = vmatmul.mubr.bf16.gmra.mxu0 %v498
      %v553 = vpop.f32.mrf.mxu0
      %v554 = vadd.f32 0.0, %v553
      %v555 = vpop.f32.mrf.mxu0
      %v556 = vpop.f32.mrf.mxu0
      %v557 = vadd.f32 0.0, %v556
      %v558 = vpop.f32.mrf.mxu0
      %559 = vmatprep.mubr.bf16.mxu0 0
      %560 = vmatmul.mubr.bf16.gmra.mxu0 %v501
      %v561 = vpop.f32.mrf.mxu0
      %v562 = vadd.f32 0.0, %v561
      %v563 = vpop.f32.mrf.mxu0
      %v564 = vpop.f32.mrf.mxu0
      %v565 = vadd.f32 0.0, %v564
      %v566 = vpop.f32.mrf.mxu0
      %567 = vdwg.mxu0
      %v576 = vunpack.c.l.b16 %v336
      %v577 = vunpack.c.l.b16 %v337
      %v578 = vunpack.c.l.b16 %v338
      %v579 = vunpack.c.l.b16 %v339
      %v580 = vunpack.c.l.b16 %v340
      %v581 = vunpack.c.l.b16 %v341
      %v582 = vunpack.c.l.b16 %v342
      %v583 = vunpack.c.l.b16 %v343
      %v584 = vpack.c.b16 %v577, %v576
      %v585 = vpack.c.b16 %v579, %v578
      %v586 = vpack.c.b16 %v581, %v580
      %v587 = vpack.c.b16 %v583, %v582
      %v590 = vunpack.c.l.b16 %v344
      %v591 = vunpack.c.l.b16 %v345
      %v592 = vpack.c.b16 %v591, %v590
      %v595 = vsel %vm490, %v584, 0
      %v598 = vsel %vm490, %v585, 0
      %v601 = vsel %vm490, %v586, 0
      %v604 = vsel %vm490, %v587, 0
      %606 = vmatprep.subr.bf16.mxu0 0
      %607 = vmatpush1.bf16.msra.mxu0 0
      %608 = vmatprep.subr.bf16.mxu0 0
      %609 = vmatpush1.bf16.msra.mxu0 0
      %610 = vmatprep.subr.bf16.mxu0 0
      %611 = vmatpush1.bf16.msra.mxu0 0
      %612 = vmatprep.subr.bf16.mxu0 0
      %613 = vmatpush1.bf16.msra.mxu0 0
      %614 = vmatprep.subr.bf16.mxu0 0
      %615 = vmatpush1.bf16.msra.mxu0 0
      %616 = vmatprep.subr.bf16.mxu0 0
      %617 = vmatpush1.bf16.msra.mxu0 0
      %618 = vmatprep.subr.bf16.mxu0 0
      %619 = vmatpush1.bf16.msra.mxu0 0
      %620 = vmatprep.subr.bf16.mxu0 0
      %621 = vmatpush1.bf16.msra.mxu0 %v592
      %622 = vmatprep.subr.bf16.mxu0 0
      %623 = vmatpush2.bf16.msra.mxu0 0
      %624 = vmatprep.subr.bf16.mxu0 0
      %625 = vmatpush2.bf16.msra.mxu0 0
      %626 = vmatprep.subr.bf16.mxu0 0
      %627 = vmatpush2.bf16.msra.mxu0 0
      %628 = vmatprep.subr.bf16.mxu0 0
      %629 = vmatpush2.bf16.msra.mxu0 0
      %630 = vmatprep.subr.bf16.mxu0 0
      %631 = vmatpush2.bf16.msra.mxu0 0
      %632 = vmatprep.subr.bf16.mxu0 0
      %633 = vmatpush2.bf16.msra.mxu0 0
      %634 = vmatprep.subr.bf16.mxu0 0
      %635 = vmatpush2.bf16.msra.mxu0 0
      %636 = vmatprep.subr.bf16.mxu0 0
      %637 = vmatpush2.bf16.msra.mxu0 0
      %638 = vmatprep.mubr.bf16.mxu0 0
      %639 = vmatmul.mubr.bf16.gmra.mxu0 %v595
      %v640 = vpop.f32.mrf.mxu0
      %v641 = vadd.f32 %v538, %v640
      %v642 = vpop.f32.mrf.mxu0
      %v643 = vpop.f32.mrf.mxu0
      %v644 = vadd.f32 %v541, %v643
      %v645 = vpop.f32.mrf.mxu0
      %646 = vmatprep.mubr.bf16.mxu0 0
      %647 = vmatmul.mubr.bf16.gmra.mxu0 %v598
      %v648 = vpop.f32.mrf.mxu0
      %v649 = vadd.f32 %v546, %v648
      %v650 = vpop.f32.mrf.mxu0
      %v651 = vpop.f32.mrf.mxu0
      %v652 = vadd.f32 %v549, %v651
      %v653 = vpop.f32.mrf.mxu0
      %654 = vmatprep.mubr.bf16.mxu0 0
      %655 = vmatmul.mubr.bf16.gmra.mxu0 %v601
      %v656 = vpop.f32.mrf.mxu0
      %v657 = vadd.f32 %v554, %v656
      %v658 = vpop.f32.mrf.mxu0
      %v659 = vpop.f32.mrf.mxu0
      %v660 = vadd.f32 %v557, %v659
      %v661 = vpop.f32.mrf.mxu0
      %662 = vmatprep.mubr.bf16.mxu0 0
      %663 = vmatmul.mubr.bf16.gmra.mxu0 %v604
      %v664 = vpop.f32.mrf.mxu0
      %v665 = vadd.f32 %v562, %v664
      %v666 = vpop.f32.mrf.mxu0
      %v667 = vpop.f32.mrf.mxu0
      %v668 = vadd.f32 %v565, %v667
      %v669 = vpop.f32.mrf.mxu0
      %670 = vdwg.mxu0
      %671 = vst [vmem:[#allocation2] sm:$0xff] %v641
      %672 = vst [vmem:[#allocation2 + $0x8] sm:$0xff] %v644
      %673 = vst [vmem:[#allocation2 + $0x10] sm:$0xff] %v649
      %674 = vst [vmem:[#allocation2 + $0x18] sm:$0xff] %v652
      %675 = vst [vmem:[#allocation2 + $0x20] sm:$0xff] %v657
      %676 = vst [vmem:[#allocation2 + $0x28] sm:$0xff] %v660
      %677 = vst [vmem:[#allocation2 + $0x30] sm:$0xff] %v665
      %678 = vst [vmem:[#allocation2 + $0x38] sm:$0xff] %v668
      %v679 = vld [vmem:[#allocation2] sm:$0xff]
      %v680 = vld [vmem:[#allocation2 + $0x8] sm:$0xff]
      %v681 = vld [vmem:[#allocation2 + $0x10] sm:$0xff]
      %v682 = vld [vmem:[#allocation2 + $0x18] sm:$0xff]
      %v683 = vld [vmem:[#allocation2 + $0x20] sm:$0xff]
      %v684 = vld [vmem:[#allocation2 + $0x28] sm:$0xff]
      %v685 = vld [vmem:[#allocation2 + $0x30] sm:$0xff]
      %s686 = scalar_lea.vmem %s308, 8
      %v687 = vld [vmem:[%s686] sm:$0xf]
      %v688 = vld [vmem:[%s686 + $0x8] sm:$0xf]
      %v689 = vld [vmem:[%s686 + $0x10] sm:$0xf]
      %v690 = vld [vmem:[%s686 + $0x18] sm:$0xf]
      %v691 = vld [vmem:[%s686 + $0x20] sm:$0xf]
      %v692 = vld [vmem:[%s686 + $0x28] sm:$0xf]
      %v693 = vld [vmem:[%s686 + $0x30] sm:$0xf]
      %s694 = scalar_lea.vmem %s2, 16
      %v695 = vld [vmem:[%s694] sm:$0xf]
      %v696 = vld [vmem:[%s694 + $0x4] sm:$0xf]
      %v697 = vld [vmem:[%s686 + $0x4] sm:$0x1]
      %v698 = vld [vmem:[%s686 + $0xc] sm:$0x1]
      %v699 = vld [vmem:[%s686 + $0x14] sm:$0x1]
      %v700 = vld [vmem:[%s686 + $0x1c] sm:$0x1]
      %v701 = vld [vmem:[%s686 + $0x24] sm:$0x1]
      %v702 = vld [vmem:[%s686 + $0x2c] sm:$0x1]
      %v703 = vld [vmem:[%s686 + $0x34] sm:$0x1]
      %v705 = vshrl.u32 %v687, 16
      %v707 = vrot.slane %v705, 4
      %v708 = vshll.u32 %v687, 16
      %v710 = vrot.slane %v708, 5
      %v711 = vor.u32 %v707, %v710
      %v712 = vrot.slane %v711, 4
      %v714 = vshll.u32 %v697, 16
      %v716 = vrot.slane %v714, 5
      %v717 = vsel %vm356, %v712, %v716
      %v719 = vshrl.u32 %v688, 16
      %v721 = vrot.slane %v719, 4
      %v722 = vshll.u32 %v688, 16
      %v724 = vrot.slane %v722, 5
      %v725 = vor.u32 %v721, %v724
      %v726 = vrot.slane %v725, 4
      %v728 = vshll.u32 %v698, 16
      %v730 = vrot.slane %v728, 5
      %v731 = vsel %vm356, %v726, %v730
      %v733 = vshrl.u32 %v689, 16
      %v735 = vrot.slane %v733, 4
      %v736 = vshll.u32 %v689, 16
      %v738 = vrot.slane %v736, 5
      %v739 = vor.u32 %v735, %v738
      %v740 = vrot.slane %v739, 4
      %v742 = vshll.u32 %v699, 16
      %v744 = vrot.slane %v742, 5
      %v745 = vsel %vm356, %v740, %v744
      %v747 = vshrl.u32 %v690, 16
      %v749 = vrot.slane %v747, 4
      %v750 = vshll.u32 %v690, 16
      %v752 = vrot.slane %v750, 5
      %v753 = vor.u32 %v749, %v752
      %v754 = vrot.slane %v753, 4
      %v756 = vshll.u32 %v700, 16
      %v758 = vrot.slane %v756, 5
      %v759 = vsel %vm356, %v754, %v758
      %v761 = vshrl.u32 %v691, 16
      %v763 = vrot.slane %v761, 4
      %v764 = vshll.u32 %v691, 16
      %v766 = vrot.slane %v764, 5
      %v767 = vor.u32 %v763, %v766
      %v768 = vrot.slane %v767, 4
      %v770 = vshll.u32 %v701, 16
      %v772 = vrot.slane %v770, 5
      %v773 = vsel %vm356, %v768, %v772
      %v775 = vshrl.u32 %v692, 16
      %v777 = vrot.slane %v775, 4
      %v778 = vshll.u32 %v692, 16
      %v780 = vrot.slane %v778, 5
      %v781 = vor.u32 %v777, %v780
      %v782 = vrot.slane %v781, 4
      %v784 = vshll.u32 %v702, 16
      %v786 = vrot.slane %v784, 5
      %v787 = vsel %vm356, %v782, %v786
      %v789 = vshrl.u32 %v693, 16
      %v791 = vrot.slane %v789, 4
      %v792 = vshll.u32 %v693, 16
      %v794 = vrot.slane %v792, 5
      %v795 = vor.u32 %v791, %v794
      %v796 = vrot.slane %v795, 4
      %v798 = vshll.u32 %v703, 16
      %v800 = vrot.slane %v798, 5
      %v801 = vsel %vm356, %v796, %v800
      %s802 = scalar_lea.vmem %s2, 24
      %v803 = vld [vmem:[%s802] sm:$0xf]
      %v804 = vld [vmem:[%s802 + $0x4] sm:$0xf]
      %v805 = vunpack.c.l.b16 %v717
      %v806 = vunpack.c.l.b16 %v731
      %v807 = vunpack.c.l.b16 %v745
      %v808 = vunpack.c.l.b16 %v759
      %v809 = vunpack.c.l.b16 %v773
      %v810 = vunpack.c.l.b16 %v787
      %v811 = vunpack.c.l.b16 %v801
      %v812 = vpack.c.b16 %v806, %v805
      %v813 = vpack.c.b16 %v808, %v807
      %v814 = vpack.c.b16 %v810, %v809
      %v815 = vpack.c.b16 %v811, %v811
      %v818 = vunpack.c.l.b16 %v803
      %v819 = vunpack.c.l.b16 %v804
      %v820 = vpack.c.b16 %v819, %v818
      %v823 = vsel %vm490, %v812, 0
      %v826 = vsel %vm490, %v813, 0
      %v829 = vsel %vm490, %v814, 0
      %v832 = vsel %vm490, %v815, 0
      %834 = vmatprep.subr.bf16.mxu0 0
      %835 = vmatpush1.bf16.msra.mxu0 0
      %836 = vmatprep.subr.bf16.mxu0 0
      %837 = vmatpush1.bf16.msra.mxu0 0
      %838 = vmatprep.subr.bf16.mxu0 0
      %839 = vmatpush1.bf16.msra.mxu0 0
      %840 = vmatprep.subr.bf16.mxu0 0
      %841 = vmatpush1.bf16.msra.mxu0 0
      %842 = vmatprep.subr.bf16.mxu0 0
      %843 = vmatpush1.bf16.msra.mxu0 0
      %844 = vmatprep.subr.bf16.mxu0 0
      %845 = vmatpush1.bf16.msra.mxu0 0
      %846 = vmatprep.subr.bf16.mxu0 0
      %847 = vmatpush1.bf16.msra.mxu0 0
      %848 = vmatprep.subr.bf16.mxu0 0
      %849 = vmatpush1.bf16.msra.mxu0 %v820
      %850 = vmatprep.subr.bf16.mxu0 0
      %851 = vmatpush2.bf16.msra.mxu0 0
      %852 = vmatprep.subr.bf16.mxu0 0
      %853 = vmatpush2.bf16.msra.mxu0 0
      %854 = vmatprep.subr.bf16.mxu0 0
      %855 = vmatpush2.bf16.msra.mxu0 0
      %856 = vmatprep.subr.bf16.mxu0 0
      %857 = vmatpush2.bf16.msra.mxu0 0
      %858 = vmatprep.subr.bf16.mxu0 0
      %859 = vmatpush2.bf16.msra.mxu0 0
      %860 = vmatprep.subr.bf16.mxu0 0
      %861 = vmatpush2.bf16.msra.mxu0 0
      %862 = vmatprep.subr.bf16.mxu0 0
      %863 = vmatpush2.bf16.msra.mxu0 0
      %864 = vmatprep.subr.bf16.mxu0 0
      %865 = vmatpush2.bf16.msra.mxu0 0
      %866 = vmatprep.mubr.bf16.mxu0 0
      %867 = vmatmul.mubr.bf16.gmra.mxu0 %v823
      %v868 = vpop.f32.mrf.mxu0
      %v869 = vadd.f32 0.0, %v868
      %v870 = vpop.f32.mrf.mxu0
      %v871 = vpop.f32.mrf.mxu0
      %v872 = vadd.f32 0.0, %v871
      %v873 = vpop.f32.mrf.mxu0
      %874 = vmatprep.mubr.bf16.mxu0 0
      %875 = vmatmul.mubr.bf16.gmra.mxu0 %v826
      %v876 = vpop.f32.mrf.mxu0
      %v877 = vadd.f32 0.0, %v876
      %v878 = vpop.f32.mrf.mxu0
      %v879 = vpop.f32.mrf.mxu0
      %v880 = vadd.f32 0.0, %v879
      %v881 = vpop.f32.mrf.mxu0
      %882 = vmatprep.mubr.bf16.mxu0 0
      %883 = vmatmul.mubr.bf16.gmra.mxu0 %v829
      %v884 = vpop.f32.mrf.mxu0
      %v885 = vadd.f32 0.0, %v884
      %v886 = vpop.f32.mrf.mxu0
      %v887 = vpop.f32.mrf.mxu0
      %v888 = vadd.f32 0.0, %v887
      %v889 = vpop.f32.mrf.mxu0
      %890 = vmatprep.mubr.bf16.mxu0 0
      %891 = vmatmul.mubr.bf16.gmra.mxu0 %v832
      %v892 = vpop.f32.mrf.mxu0
      %v893 = vadd.f32 0.0, %v892
      %v894 = vpop.f32.mrf.mxu0
      %v895 = vpop.f32.mrf.mxu0
      %v896 = vpop.f32.mrf.mxu0
      %897 = vdwg.mxu0
      %v905 = vunpack.c.l.b16 %v687
      %v906 = vunpack.c.l.b16 %v688
      %v907 = vunpack.c.l.b16 %v689
      %v908 = vunpack.c.l.b16 %v690
      %v909 = vunpack.c.l.b16 %v691
      %v910 = vunpack.c.l.b16 %v692
      %v911 = vunpack.c.l.b16 %v693
      %v912 = vpack.c.b16 %v906, %v905
      %v913 = vpack.c.b16 %v908, %v907
      %v914 = vpack.c.b16 %v910, %v909
      %v915 = vpack.c.b16 %v911, %v911
      %v918 = vunpack.c.l.b16 %v695
      %v919 = vunpack.c.l.b16 %v696
      %v920 = vpack.c.b16 %v919, %v918
      %v923 = vsel %vm490, %v912, 0
      %v926 = vsel %vm490, %v913, 0
      %v929 = vsel %vm490, %v914, 0
      %v932 = vsel %vm490, %v915, 0
      %934 = vmatprep.subr.bf16.mxu0 0
      %935 = vmatpush1.bf16.msra.mxu0 0
      %936 = vmatprep.subr.bf16.mxu0 0
      %937 = vmatpush1.bf16.msra.mxu0 0
      %938 = vmatprep.subr.bf16.mxu0 0
      %939 = vmatpush1.bf16.msra.mxu0 0
      %940 = vmatprep.subr.bf16.mxu0 0
      %941 = vmatpush1.bf16.msra.mxu0 0
      %942 = vmatprep.subr.bf16.mxu0 0
      %943 = vmatpush1.bf16.msra.mxu0 0
      %944 = vmatprep.subr.bf16.mxu0 0
      %945 = vmatpush1.bf16.msra.mxu0 0
      %946 = vmatprep.subr.bf16.mxu0 0
      %947 = vmatpush1.bf16.msra.mxu0 0
      %948 = vmatprep.subr.bf16.mxu0 0
      %949 = vmatpush1.bf16.msra.mxu0 %v920
      %950 = vmatprep.subr.bf16.mxu0 0
      %951 = vmatpush2.bf16.msra.mxu0 0
      %952 = vmatprep.subr.bf16.mxu0 0
      %953 = vmatpush2.bf16.msra.mxu0 0
      %954 = vmatprep.subr.bf16.mxu0 0
      %955 = vmatpush2.bf16.msra.mxu0 0
      %956 = vmatprep.subr.bf16.mxu0 0
      %957 = vmatpush2.bf16.msra.mxu0 0
      %958 = vmatprep.subr.bf16.mxu0 0
      %959 = vmatpush2.bf16.msra.mxu0 0
      %960 = vmatprep.subr.bf16.mxu0 0
      %961 = vmatpush2.bf16.msra.mxu0 0
      %962 = vmatprep.subr.bf16.mxu0 0
      %963 = vmatpush2.bf16.msra.mxu0 0
      %964 = vmatprep.subr.bf16.mxu0 0
      %965 = vmatpush2.bf16.msra.mxu0 0
      %966 = vmatprep.mubr.bf16.mxu0 0
      %967 = vmatmul.mubr.bf16.gmra.mxu0 %v923
      %v968 = vpop.f32.mrf.mxu0
      %v969 = vadd.f32 %v869, %v968
      %v970 = vpop.f32.mrf.mxu0
      %v971 = vpop.f32.mrf.mxu0
      %v972 = vadd.f32 %v872, %v971
      %v973 = vpop.f32.mrf.mxu0
      %974 = vmatprep.mubr.bf16.mxu0 0
      %975 = vmatmul.mubr.bf16.gmra.mxu0 %v926
      %v976 = vpop.f32.mrf.mxu0
      %v977 = vadd.f32 %v877, %v976
      %v978 = vpop.f32.mrf.mxu0
      %v979 = vpop.f32.mrf.mxu0
      %v980 = vadd.f32 %v880, %v979
      %v981 = vpop.f32.mrf.mxu0
      %982 = vmatprep.mubr.bf16.mxu0 0
      %983 = vmatmul.mubr.bf16.gmra.mxu0 %v929
      %v984 = vpop.f32.mrf.mxu0
      %v985 = vadd.f32 %v885, %v984
      %v986 = vpop.f32.mrf.mxu0
      %v987 = vpop.f32.mrf.mxu0
      %v988 = vadd.f32 %v888, %v987
      %v989 = vpop.f32.mrf.mxu0
      %990 = vmatprep.mubr.bf16.mxu0 0
      %991 = vmatmul.mubr.bf16.gmra.mxu0 %v932
      %v992 = vpop.f32.mrf.mxu0
      %v993 = vadd.f32 %v893, %v992
      %v994 = vpop.f32.mrf.mxu0
      %v995 = vpop.f32.mrf.mxu0
      %v996 = vpop.f32.mrf.mxu0
      %997 = vdwg.mxu0
      %v998 = vadd.f32 %v679, %v969
      %v999 = vadd.f32 %v680, %v972
      %v1000 = vadd.f32 %v681, %v977
      %v1001 = vadd.f32 %v682, %v980
      %v1002 = vadd.f32 %v683, %v985
      %v1003 = vadd.f32 %v684, %v988
      %v1004 = vadd.f32 %v685, %v993
      %1005 = vst [vmem:[#allocation2] sm:$0xff] %v998
      %1006 = vst [vmem:[#allocation2 + $0x8] sm:$0xff] %v999
      %1007 = vst [vmem:[#allocation2 + $0x10] sm:$0xff] %v1000
      %1008 = vst [vmem:[#allocation2 + $0x18] sm:$0xff] %v1001
      %1009 = vst [vmem:[#allocation2 + $0x20] sm:$0xff] %v1002
      %1010 = vst [vmem:[#allocation2 + $0x28] sm:$0xff] %v1003
      %1011 = vst [vmem:[#allocation2 + $0x30] sm:$0xff] %v1004
      %v1012 = vld [vmem:[#allocation2 + $0x38] sm:$0xff]
      %v1013 = vld [vmem:[%s325] sm:$0xf]
      %v1014 = vld [vmem:[%s694] sm:$0xf]
      %v1015 = vld [vmem:[%s694 + $0x4] sm:$0xf]
      %v1016 = vld [vmem:[%s325 + $0x4] sm:$0x1]
      %v1017 = vld [vmem:[%s802] sm:$0xf]
      %v1018 = vld [vmem:[%s802 + $0x4] sm:$0xf]
      %v1021 = vunpack.c.l.b16 %v1013
      %v1022 = vunpack.c.l.b16 %v1016
      %v1023 = vpack.c.b16 %v1022, %v1021
      %v1025 = vshrl.u32 %v1023, 16
      %v1027 = vshll.u32 %v1023, 16
      %v1029 = vrot.slane %v1027, 1
      %v1030 = vor.u32 %v1025, %v1029
      %v1033 = vunpack.c.l.b16 %v1017
      %v1034 = vunpack.c.l.b16 %v1018
      %v1035 = vpack.c.b16 %v1034, %v1033
      %v1038 = vsel %vm490, %v1030, 0
      %1040 = vmatprep.subr.bf16.mxu0 0
      %1041 = vmatpush1.bf16.msra.mxu0 0
      %1042 = vmatprep.subr.bf16.mxu0 0
      %1043 = vmatpush1.bf16.msra.mxu0 0
      %1044 = vmatprep.subr.bf16.mxu0 0
      %1045 = vmatpush1.bf16.msra.mxu0 0
      %1046 = vmatprep.subr.bf16.mxu0 0
      %1047 = vmatpush1.bf16.msra.mxu0 0
      %1048 = vmatprep.subr.bf16.mxu0 0
      %1049 = vmatpush1.bf16.msra.mxu0 0
      %1050 = vmatprep.subr.bf16.mxu0 0
      %1051 = vmatpush1.bf16.msra.mxu0 0
      %1052 = vmatprep.subr.bf16.mxu0 0
      %1053 = vmatpush1.bf16.msra.mxu0 0
      %1054 = vmatprep.subr.bf16.mxu0 0
      %1055 = vmatpush1.bf16.msra.mxu0 %v1035
      %1056 = vmatprep.subr.bf16.mxu0 0
      %1057 = vmatpush2.bf16.msra.mxu0 0
      %1058 = vmatprep.subr.bf16.mxu0 0
      %1059 = vmatpush2.bf16.msra.mxu0 0
      %1060 = vmatprep.subr.bf16.mxu0 0
      %1061 = vmatpush2.bf16.msra.mxu0 0
      %1062 = vmatprep.subr.bf16.mxu0 0
      %1063 = vmatpush2.bf16.msra.mxu0 0
      %1064 = vmatprep.subr.bf16.mxu0 0
      %1065 = vmatpush2.bf16.msra.mxu0 0
      %1066 = vmatprep.subr.bf16.mxu0 0
      %1067 = vmatpush2.bf16.msra.mxu0 0
      %1068 = vmatprep.subr.bf16.mxu0 0
      %1069 = vmatpush2.bf16.msra.mxu0 0
      %1070 = vmatprep.subr.bf16.mxu0 0
      %1071 = vmatpush2.bf16.msra.mxu0 0
      %1072 = vmatprep.mubr.bf16.mxu0 0
      %1073 = vmatmul.mubr.bf16.gmra.mxu0 %v1038
      %v1074 = vpop.f32.mrf.mxu0
      %v1075 = vadd.f32 0.0, %v1074
      %v1076 = vpop.f32.mrf.mxu0
      %v1077 = vpop.f32.mrf.mxu0
      %v1078 = vpop.f32.mrf.mxu0
      %1079 = vdwg.mxu0
      %v1082 = vunpack.c.l.b16 %v1014
      %v1083 = vunpack.c.l.b16 %v1015
      %v1084 = vpack.c.b16 %v1083, %v1082
      %v1087 = vsel %vm490, %v1013, 0
      %1089 = vmatprep.subr.bf16.mxu0 0
      %1090 = vmatpush1.bf16.msra.mxu0 0
      %1091 = vmatprep.subr.bf16.mxu0 0
      %1092 = vmatpush1.bf16.msra.mxu0 0
      %1093 = vmatprep.subr.bf16.mxu0 0
      %1094 = vmatpush1.bf16.msra.mxu0 0
      %1095 = vmatprep.subr.bf16.mxu0 0
      %1096 = vmatpush1.bf16.msra.mxu0 0
      %1097 = vmatprep.subr.bf16.mxu0 0
      %1098 = vmatpush1.bf16.msra.mxu0 0
      %1099 = vmatprep.subr.bf16.mxu0 0
      %1100 = vmatpush1.bf16.msra.mxu0 0
      %1101 = vmatprep.subr.bf16.mxu0 0
      %1102 = vmatpush1.bf16.msra.mxu0 0
      %1103 = vmatprep.subr.bf16.mxu0 0
      %1104 = vmatpush1.bf16.msra.mxu0 %v1084
      %1105 = vmatprep.subr.bf16.mxu0 0
      %1106 = vmatpush2.bf16.msra.mxu0 0
      %1107 = vmatprep.subr.bf16.mxu0 0
      %1108 = vmatpush2.bf16.msra.mxu0 0
      %1109 = vmatprep.subr.bf16.mxu0 0
      %1110 = vmatpush2.bf16.msra.mxu0 0
      %1111 = vmatprep.subr.bf16.mxu0 0
      %1112 = vmatpush2.bf16.msra.mxu0 0
      %1113 = vmatprep.subr.bf16.mxu0 0
      %1114 = vmatpush2.bf16.msra.mxu0 0
      %1115 = vmatprep.subr.bf16.mxu0 0
      %1116 = vmatpush2.bf16.msra.mxu0 0
      %1117 = vmatprep.subr.bf16.mxu0 0
      %1118 = vmatpush2.bf16.msra.mxu0 0
      %1119 = vmatprep.subr.bf16.mxu0 0
      %1120 = vmatpush2.bf16.msra.mxu0 0
      %1121 = vmatprep.mubr.bf16.mxu0 0
      %1122 = vmatmul.mubr.bf16.gmra.mxu0 %v1087
      %v1123 = vpop.f32.mrf.mxu0
      %v1124 = vadd.f32 %v1075, %v1123
      %v1125 = vpop.f32.mrf.mxu0
      %v1126 = vpop.f32.mrf.mxu0
      %v1127 = vpop.f32.mrf.mxu0
      %1128 = vdwg.mxu0
      %v1129 = vadd.f32 %v1012, %v1124
      %1130 = vst [vmem:[#allocation2 + $0x38] sm:$0xff] %v1129
      %v1131 = vld [vmem:[#allocation2] sm:$0xff]
      %v1132 = vld [vmem:[#allocation2 + $0x8] sm:$0xff]
      %v1133 = vld [vmem:[#allocation2 + $0x10] sm:$0xff]
      %v1134 = vld [vmem:[#allocation2 + $0x18] sm:$0xff]
      %v1135 = vld [vmem:[#allocation2 + $0x20] sm:$0xff]
      %v1136 = vld [vmem:[#allocation2 + $0x28] sm:$0xff]
      %v1137 = vld [vmem:[#allocation2 + $0x30] sm:$0xff]
      %v1138 = vld [vmem:[#allocation2 + $0x38] sm:$0xff]
      %1139 = vxpose.xlu0.b32.start [1/16] %v1131, 128
      %1140 = vxpose.xlu0.b32.cont [2/16] %v1132, 128
      %1141 = vxpose.xlu0.b32.cont [3/16] %v1133, 128
      %1142 = vxpose.xlu0.b32.cont [4/16] %v1134, 128
      %1143 = vxpose.xlu0.b32.cont [5/16] %v1135, 128
      %1144 = vxpose.xlu0.b32.cont [6/16] %v1136, 128
      %1145 = vxpose.xlu0.b32.cont [7/16] %v1137, 128
      %1146 = vxpose.xlu0.b32.cont [8/16] %v1138, 128
      %1147 = vxpose.xlu0.b32.cont [9/16] 0.0, 128
      %1148 = vxpose.xlu0.b32.cont [10/16] 0.0, 128
      %1149 = vxpose.xlu0.b32.cont [11/16] 0.0, 128
      %1150 = vxpose.xlu0.b32.cont [12/16] 0.0, 128
      %1151 = vxpose.xlu0.b32.cont [13/16] 0.0, 128
      %1152 = vxpose.xlu0.b32.cont [14/16] 0.0, 128
      %1153 = vxpose.xlu0.b32.cont [15/16] 0.0, 128
      %1154 = vxpose.xlu0.b32.end [16/16] 0.0, 128
      %v1155 = vpop.trf.xlu0
      %v1156 = vpop.trf.xlu0
      %v1157 = vpop.trf.xlu0
      %v1158 = vpop.trf.xlu0
      %v1159 = vpop.trf.xlu0
      %v1160 = vpop.trf.xlu0
      %v1161 = vpop.trf.xlu0
      %v1162 = vpop.trf.xlu0
      %v1163 = vpop.trf.xlu0
      %v1164 = vpop.trf.xlu0
      %v1165 = vpop.trf.xlu0
      %v1166 = vpop.trf.xlu0
      %v1167 = vpop.trf.xlu0
      %v1168 = vpop.trf.xlu0
      %v1169 = vpop.trf.xlu0
      %v1170 = vpop.trf.xlu0
      %v1171 = vld [vmem:[%s3] sm:$0xff]
      %1173 = vset.pattern.permute.xlu0 0
      %1174 = vperm.xlu0 %1173, %v1171
      %v1175 = vpop.permute.xlu0 %1174
      %v1177 = vmul.f32 %v1155, %v1175
      %v1178 = vld [vmem:[%s4] sm:$0xff]
      %1180 = vset.pattern.permute.xlu0 0
      %1181 = vperm.xlu0 %1180, %v1178
      %v1182 = vpop.permute.xlu0 %1181
      %v1184 = vadd.f32 %v1177, %v1182
      %vm1185 = vcmask 523264
      %1186 = vst.msk [vmem:[%s334] sm:$0xff] %vm1185, %v1184
      %p1187 = scmp.lt.s32.totalorder %s20, 1
      %s1188 = scalar_select %p1187, %s20, 1
      %p1189 = scmp.lt.s32.totalorder %s21, 0
      %s1190 = scalar_select %p1189, %s21, 0
      %s1191 = sadd.s32 %s1190, %s1188
      %s1192 = smul.addr %s1191, 8
      %s1193 = scalar_lea.vmem %s5, %s1192
      // Predicated region
      $region41: #{downsample.3} parent=39 // pred_check
        %p1194 = pneg %p171
      $region42: #{downsample.3} parent=39 // pred_check_branch
        %1196 = sbr.rel (%p1194) target = $region44
      $region43: #{downsample.3} parent=39 // pred_region
        _
      $region44: #{downsample.3} parent=39 // pred_fallthru
        _
    $region40: #{downsample.3} parent=5 // pred_fallthru
      _
    %p1197 = scmp.le.s32.totalorder 2, %s11
    // Predicated region
    $region45: #{downsample.3} parent=5 // pred_check
      %p1198 = pneg %p1197
    $region46: #{downsample.3} parent=5 // pred_check_branch
      %1200 = sbr.rel (%p1198) target = $region48
    $region47: #{downsample.3} parent=5 // pred_region
      %s1201 = ssub.s32 %s11, 2
      // Predicated region
      $region49: #{downsample.3} parent=47 // pred_check
        %p1202 = pneg %p177
      $region50: #{downsample.3} parent=47 // pred_check_branch
        %1204 = sbr.rel (%p1202) target = $region52
      $region51: #{downsample.3} parent=47 // pred_region
        %p1205 = scmp.lt.s32.totalorder %s22, 1
        %s1206 = scalar_select %p1205, %s22, 1
        %p1207 = scmp.lt.s32.totalorder %s23, 0
        %s1208 = scalar_select %p1207, %s23, 0
        %s1209 = sadd.s32 %s1208, %s1206
        %s1210 = smul.addr %s1209, 8
        %s1211 = scalar_lea.vmem %s5, %s1210
      $region52: #{downsample.3} parent=47 // pred_fallthru
        _
    $region48: #{downsample.3} parent=5 // pred_fallthru
      _
  $region6: #{downsample.3} parent=0 // loop_footer
    %s15 = sadd.s32 1, %s11
  $region7: #{downsample.3} parent=0 // loop_footer_branch
    %10 = sbr.rel target = $region3
  $region8: #{downsample.3} parent=0 // loop_exit
    _

// kernel: downsample.2
$region0: #{downsample.2}
  #allocation0 [shape = 'u32[]', space=smem, size = 0x4, offset = 0x4, fixed_abs, tag = 'smem constant byte address 0x4 - core index']
  #allocation1 [shape = 'u32[144,128]{1,0:T(1,128)}', space=vmem, size = 0x12000, scoped, tag = 'internal scratch']
  #allocation2 [shape = 'f32[64,128]{1,0:T(8,128)}', space=vmem, size = 0x8000, scoped, tag = 'scratch operand']
  %s0 = inlined_call_operand.vmem [shape: bf16[2,9,9,16], index: 0, kind: input, shape index: {}, may-alias: {0,1}]
  %s1 = inlined_call_operand.vmem [shape: bf16[2,9,9,16], index: 1, kind: input, shape index: {}, may-alias: {0,1}]
  %s2 = inlined_call_operand.vmem [shape: bf16[4,16,128], index: 2, kind: input, shape index: {}]
  %s3 = inlined_call_operand.vmem [shape: f32[2,1,128], index: 3, kind: output, shape index: {0}]
  %s4 = inlined_call_operand.vmem [shape: f32[2,1,128], index: 4, kind: output, shape index: {1}]
  %5 = xla_tuple %s3, %s4
  %s6 = sld [smem:[#allocation0]]
  $region57: #{downsample.2} parent=0
    _
  %s8 = ssub.s32 1, %s6
  %s9 = scalar_select 0, %s8, %s6
  loop: start=0, step=1, limit=4
  $region2: #{downsample.2} parent=0 // loop_pre_header
    _
  $region3: #{downsample.2} parent=0 // loop_header
    %s11 = sphi 0, %s15
    %p12 = scmp.ge.s32.totalorder %s11, 4
    %s18 = sphi 0, %s30
    %s19 = sphi 0, %s26
    %s20 = sphi 0, %s18
    %s21 = sphi 0, %s19
    %s22 = sphi 0, %s20
    %s23 = sphi 0, %s21
    %s35 = sphi 0, %s37
    %s38 = sphi 0, %s35
    %s39 = sphi 0, %s38
    %s55 = sphi 0, %s39
    %s67 = sphi 0, %s69
    %s70 = sphi 0, %s67
    %s71 = sphi 0, %s70
    %s87 = sphi 0, %s71
    %s91 = sphi 0, %s91
    %s93 = sphi 0, %s91
    %s94 = sphi 0, %s93
    %s108 = sphi 0, %s94
    %s114 = sphi 0, %s116
    %s117 = sphi 0, %s114
    %s118 = sphi 0, %s117
    %s134 = sphi 0, %s118
    %s140 = sphi 0, %s142
    %s143 = sphi 0, %s140
    %s144 = sphi 0, %s143
    %s160 = sphi 0, %s144
  $region4: #{downsample.2} parent=0 // loop_header_branch
    %14 = sbr.rel (%p12) target = $region8
  $region5: #{downsample.2} parent=0 // loop_body
    %s16 = ssub.s32 %s11, 1
    %s17 = ssub.s32 %s11, 2
    %s24 = sadd.s32 1, %s19
    %p25 = scmp.ge.s32.totalorder %s24, 1
    %s26 = scalar_select %p25, 0, %s24
    %s27 = sadd.s32 1, %s18
    %s28 = scalar_select %p25, %s27, %s18
    %p29 = scmp.ge.s32.totalorder %s28, 2
    %s30 = scalar_select %p29, 0, %s28
    %s31 = ssub.s32 %s18, %s30
    %s32 = ssub.s32 %s19, %s26
    %s33 = sor.u32 %s31, %s32
    %p34 = scmp.eq.s32.totalorder %s33, 0
    %s36 = sadd.s32 %s35, 1
    %s37 = scalar_select %p34, %s35, %s36
    %p40 = pneg %p34
    %p41 = scmp.eq.s32.totalorder %s11, 1
    %p42 = por %p40, %p41
    %p43 = scmp.ne.s32.totalorder %s35, %s38
    %p44 = scmp.eq.s32.totalorder %s11, 0
    %p45 = por %p43, %p44
    %p46 = scmp.ne.s32.totalorder %s35, %s38
    %p47 = scmp.eq.s32.totalorder %s16, 1
    %p48 = por %p46, %p47
    %p49 = scmp.ne.s32.totalorder %s38, %s39
    %p50 = scmp.eq.s32.totalorder %s16, 0
    %p51 = por %p49, %p50
    %p52 = scmp.ne.s32.totalorder %s38, %s39
    %p53 = scmp.eq.s32.totalorder %s17, 1
    %p54 = por %p52, %p53
    %p56 = scmp.ne.s32.totalorder %s39, %s55
    %p57 = scmp.eq.s32.totalorder %s17, 0
    %p58 = por %p56, %p57
    %s59 = sadd.s32 %s19, 1
    %s60 = smul.u32 %s59, 8
    %s61 = sadd.s32 %s26, 1
    %s62 = smul.u32 %s61, 8
    %s63 = ssub.s32 %s18, %s30
    %s64 = ssub.s32 %s60, %s62
    %s65 = sor.u32 %s63, %s64
    %p66 = scmp.eq.s32.totalorder %s65, 0
    %s68 = sadd.s32 %s67, 1
    %s69 = scalar_select %p66, %s67, %s68
    %p72 = pneg %p66
    %p73 = scmp.eq.s32.totalorder %s11, 1
    %p74 = por %p72, %p73
    %p75 = scmp.ne.s32.totalorder %s67, %s70
    %p76 = scmp.eq.s32.totalorder %s11, 0
    %p77 = por %p75, %p76
    %p78 = scmp.ne.s32.totalorder %s67, %s70
    %p79 = scmp.eq.s32.totalorder %s16, 1
    %p80 = por %p78, %p79
    %p81 = scmp.ne.s32.totalorder %s70, %s71
    %p82 = scmp.eq.s32.totalorder %s16, 0
    %p83 = por %p81, %p82
    %p84 = scmp.ne.s32.totalorder %s70, %s71
    %p85 = scmp.eq.s32.totalorder %s17, 1
    %p86 = por %p84, %p85
    %p88 = scmp.ne.s32.totalorder %s71, %s87
    %p89 = scmp.eq.s32.totalorder %s17, 0
    %p90 = por %p88, %p89
    %s92 = sadd.s32 %s91, 1
    %p95 = scmp.eq.s32.totalorder %s11, 1
    %p96 = scmp.ne.s32.totalorder %s91, %s93
    %p97 = scmp.eq.s32.totalorder %s11, 0
    %p98 = por %p96, %p97
    %p99 = scmp.ne.s32.totalorder %s91, %s93
    %p100 = scmp.eq.s32.totalorder %s16, 1
    %p101 = por %p99, %p100
    %p102 = scmp.ne.s32.totalorder %s93, %s94
    %p103 = scmp.eq.s32.totalorder %s16, 0
    %p104 = por %p102, %p103
    %p105 = scmp.ne.s32.totalorder %s93, %s94
    %p106 = scmp.eq.s32.totalorder %s17, 1
    %p107 = por %p105, %p106
    %p109 = scmp.ne.s32.totalorder %s94, %s108
    %p110 = scmp.eq.s32.totalorder %s17, 0
    %p111 = por %p109, %p110
    %s112 = ssub.s32 %s18, %s30
    %p113 = scmp.eq.s32.totalorder %s112, 0
    %s115 = sadd.s32 %s114, 1
    %s116 = scalar_select %p113, %s114, %s115
    %p119 = pneg %p113
    %p120 = scmp.eq.s32.totalorder %s11, 1
    %p121 = por %p119, %p120
    %p122 = scmp.ne.s32.totalorder %s114, %s117
    %p123 = scmp.eq.s32.totalorder %s11, 0
    %p124 = por %p122, %p123
    %p125 = scmp.ne.s32.totalorder %s114, %s117
    %p126 = scmp.eq.s32.totalorder %s16, 1
    %p127 = por %p125, %p126
    %p128 = scmp.ne.s32.totalorder %s117, %s118
    %p129 = scmp.eq.s32.totalorder %s16, 0
    %p130 = por %p128, %p129
    %p131 = scmp.ne.s32.totalorder %s117, %s118
    %p132 = scmp.eq.s32.totalorder %s17, 1
    %p133 = por %p131, %p132
    %p135 = scmp.ne.s32.totalorder %s118, %s134
    %p136 = scmp.eq.s32.totalorder %s17, 0
    %p137 = por %p135, %p136
    %s138 = ssub.s32 %s18, %s30
    %p139 = scmp.eq.s32.totalorder %s138, 0
    %s141 = sadd.s32 %s140, 1
    %s142 = scalar_select %p139, %s140, %s141
    %p145 = pneg %p139
    %p146 = scmp.eq.s32.totalorder %s11, 1
    %p147 = por %p145, %p146
    %p148 = scmp.ne.s32.totalorder %s140, %s143
    %p149 = scmp.eq.s32.totalorder %s11, 0
    %p150 = por %p148, %p149
    %p151 = scmp.ne.s32.totalorder %s140, %s143
    %p152 = scmp.eq.s32.totalorder %s16, 1
    %p153 = por %p151, %p152
    %p154 = scmp.ne.s32.totalorder %s143, %s144
    %p155 = scmp.eq.s32.totalorder %s16, 0
    %p156 = por %p154, %p155
    %p157 = scmp.ne.s32.totalorder %s143, %s144
    %p158 = scmp.eq.s32.totalorder %s17, 1
    %p159 = por %p157, %p158
    %p161 = scmp.ne.s32.totalorder %s144, %s160
    %p162 = scmp.eq.s32.totalorder %s17, 0
    %p163 = por %p161, %p162
    %p164 = scmp.le.s32.totalorder 1, %s11
    %p165 = scmp.lt.s32.totalorder %s11, 3
    %p166 = pnand %p164, %p165
    %p167 = pneg %p166
    // Predicated region
    $region9: #{downsample.2} parent=5 // pred_check
      _
    $region10: #{downsample.2} parent=5 // pred_check_branch
      %169 = sbr.rel (%p166) target = $region12
    $region11: #{downsample.2} parent=5 // pred_region
      %s170 = ssub.s32 %s11, 1
      // Predicated region
      $region13: #{downsample.2} parent=11 // pred_check
        %p171 = pneg %p104
      $region14: #{downsample.2} parent=11 // pred_check_branch
        %173 = sbr.rel (%p171) target = $region16
      $region15: #{downsample.2} parent=11 // pred_region
        _
      $region16: #{downsample.2} parent=11 // pred_fallthru
        _
    $region12: #{downsample.2} parent=5 // pred_fallthru
      _
    %p174 = scmp.lt.s32.totalorder %s11, 2
    // Predicated region
    $region17: #{downsample.2} parent=5 // pred_check
      %p175 = pneg %p174
    $region18: #{downsample.2} parent=5 // pred_check_branch
      %177 = sbr.rel (%p175) target = $region20
    $region19: #{downsample.2} parent=5 // pred_region
      // Predicated region
      $region21: #{downsample.2} parent=19 // pred_check
        %p178 = pneg %p45
      $region22: #{downsample.2} parent=19 // pred_check_branch
        %180 = sbr.rel (%p178) target = $region24
      $region23: #{downsample.2} parent=19 // pred_region
        %s181 = smul.u32 8, %s19
        %s182 = ssub.s32 9, %s181
        %p183 = scmp.lt.s32.totalorder %s182, 8
        %s184 = scalar_select %p183, %s182, 8
        %s185 = smul.u32 64, %s184
        %s186 = smul.u32 %s185, 2
        %p187 = scmp.lt.s32.totalorder %s18, 1
        %s188 = scalar_select %p187, %s18, 1
        %p189 = scmp.lt.s32.totalorder %s181, 8
        %s190 = scalar_select %p189, %s181, 8
        %s191 = smul.addr %s190, 2
        %s192 = smul.addr %s188, 18
        %s193 = sadd.s32 %s191, %s192
        %s194 = smul.addr %s193, 4
        %s195 = scalar_lea.vmem %s0, %s194
        %s196 = smul.u32 8, %s19
        %s197 = ssub.s32 9, %s196
        %p198 = scmp.lt.s32.totalorder %s197, 8
        %s199 = scalar_select %p198, %s197, 8
        %s200 = smul.u32 64, %s199
        %s201 = smul.u32 %s200, 2
      $region24: #{downsample.2} parent=19 // pred_fallthru
        _
      // Predicated region
      $region25: #{downsample.2} parent=19 // pred_check
        %p202 = pneg %p77
      $region26: #{downsample.2} parent=19 // pred_check_branch
        %204 = sbr.rel (%p202) target = $region28
      $region27: #{downsample.2} parent=19 // pred_region
        %s205 = sadd.s32 %s19, 1
        %s206 = smul.u32 %s205, 8
        %p207 = scmp.lt.s32.totalorder %s18, 1
        %s208 = scalar_select %p207, %s18, 1
        %p209 = scmp.lt.s32.totalorder %s206, 8
        %s210 = scalar_select %p209, %s206, 8
        %s211 = smul.addr %s210, 2
        %s212 = smul.addr %s208, 18
        %s213 = sadd.s32 %s211, %s212
        %s214 = smul.addr %s213, 4
        %s215 = scalar_lea.vmem %s1, %s214
        %s216 = sadd.s32 %s19, 1
        %s217 = smul.u32 %s216, 8
      $region28: #{downsample.2} parent=19 // pred_fallthru
        _
    $region20: #{downsample.2} parent=5 // pred_fallthru
      _
    %p218 = scmp.le.s32.totalorder 1, %s11
    %p219 = scmp.lt.s32.totalorder %s11, 3
    %p220 = pnand %p218, %p219
    %p221 = pneg %p220
    // Predicated region
    $region29: #{downsample.2} parent=5 // pred_check
      _
    $region30: #{downsample.2} parent=5 // pred_check_branch
      %223 = sbr.rel (%p220) target = $region32
    $region31: #{downsample.2} parent=5 // pred_region
      %s224 = ssub.s32 %s11, 1
      %s225 = smul.u32 8, %s21
      %s226 = ssub.s32 9, %s225
      %p227 = scmp.lt.s32.totalorder %s226, 8
      %s228 = scalar_select %p227, %s226, 8
      %s229 = smul.u32 64, %s228
      %s230 = smul.u32 %s229, 2
      %p231 = scmp.lt.s32.totalorder %s20, 1
      %s232 = scalar_select %p231, %s20, 1
      %p233 = scmp.lt.s32.totalorder %s225, 8
      %s234 = scalar_select %p233, %s225, 8
      %s235 = smul.addr %s234, 2
      %s236 = smul.addr %s232, 18
      %s237 = sadd.s32 %s235, %s236
      %s238 = smul.addr %s237, 4
      %s239 = scalar_lea.vmem %s0, %s238
      %p240 = pneg %p51
      %p241 = pneg %p48
      %s242 = sadd.s32 %s21, 1
      %s243 = smul.u32 %s242, 8
      %p244 = scmp.lt.s32.totalorder %s20, 1
      %s245 = scalar_select %p244, %s20, 1
      %p246 = scmp.lt.s32.totalorder %s243, 8
      %s247 = scalar_select %p246, %s243, 8
      %s248 = smul.addr %s247, 2
      %s249 = smul.addr %s245, 18
      %s250 = sadd.s32 %s248, %s249
      %s251 = smul.addr %s250, 4
      %s252 = scalar_lea.vmem %s1, %s251
      %p253 = pneg %p83
      %p254 = pneg %p80
      %p255 = pneg %p104
      %p256 = pneg %p101
      %p257 = pneg %p130
      %p258 = pneg %p127
      %p259 = scmp.lt.s32.totalorder %s20, 1
      %s260 = scalar_select %p259, %s20, 1
      %s261 = scalar_lea.vmem %s3, %s260
      %p262 = pneg %p156
      %p263 = pneg %p153
      %p264 = scmp.lt.s32.totalorder %s20, 1
      %s265 = scalar_select %p264, %s20, 1
      %s266 = scalar_lea.vmem %s4, %s265
      %s267 = smul.u32 8, %s21
      %s268 = ssub.s32 9, %s267
      %p269 = scmp.lt.s32.totalorder %s268, 8
      %s270 = scalar_select %p269, %s268, 8
      %s271 = smul.u32 64, %s270
      %s272 = smul.u32 %s271, 2
      %p273 = scmp.lt.s32.totalorder %s20, 1
      %s274 = scalar_select %p273, %s20, 1
      %p275 = scmp.lt.s32.totalorder %s267, 8
      %s276 = scalar_select %p275, %s267, 8
      %s277 = smul.addr %s276, 2
      %s278 = smul.addr %s274, 18
      %s279 = sadd.s32 %s277, %s278
      %s280 = smul.addr %s279, 4
      %s281 = scalar_lea.vmem %s0, %s280
      %s282 = smul.u32 8, %s21
      %s283 = ssub.s32 9, %s282
      %p284 = scmp.lt.s32.totalorder %s283, 8
      %s285 = scalar_select %p284, %s283, 8
      %s286 = smul.u32 64, %s285
      %s287 = smul.u32 %s286, 2
      %s288 = sadd.s32 %s21, 1
      %s289 = smul.u32 %s288, 8
      %p290 = scmp.lt.s32.totalorder %s20, 1
      %s291 = scalar_select %p290, %s20, 1
      %p292 = scmp.lt.s32.totalorder %s289, 8
      %s293 = scalar_select %p292, %s289, 8
      %s294 = smul.addr %s293, 2
      %s295 = smul.addr %s291, 18
      %s296 = sadd.s32 %s294, %s295
      %s297 = smul.addr %s296, 4
      %s298 = scalar_lea.vmem %s1, %s297
      %s299 = sadd.s32 %s21, 1
      %s300 = smul.u32 %s299, 8
      %p301 = scmp.lt.s32.totalorder %s20, 1
      %s302 = scalar_select %p301, %s20, 1
      %s303 = scalar_lea.vmem %s3, %s302
      %p304 = scmp.lt.s32.totalorder %s20, 1
      %s305 = scalar_select %p304, %s20, 1
      %s306 = scalar_lea.vmem %s4, %s305
      %p308 = scmp.eq.s32.totalorder %s21, 0
      // Predicated region
      $region33: #{downsample.2} parent=31 // pred_check
        %p309 = pneg %p308
      $region34: #{downsample.2} parent=31 // pred_check_branch
        %311 = sbr.rel (%p309) target = $region36
      $region35: #{downsample.2} parent=31 // pred_region
        %312 = vst [vmem:[%s303] sm:$0x1] 0.0
        %313 = vst [vmem:[%s306] sm:$0x1] 0.0
      $region36: #{downsample.2} parent=31 // pred_fallthru
        _
      %v314 = vld [vmem:[%s281] sm:$0xf]
      %v315 = vld [vmem:[%s281 + $0x8] sm:$0xf]
      %v316 = vld [vmem:[%s281 + $0x10] sm:$0xf]
      %v317 = vld [vmem:[%s281 + $0x18] sm:$0xf]
      %v318 = vld [vmem:[%s281 + $0x20] sm:$0xf]
      %v319 = vld [vmem:[%s281 + $0x28] sm:$0xf]
      %v320 = vld [vmem:[%s281 + $0x30] sm:$0xf]
      %v321 = vld [vmem:[%s281 + $0x38] sm:$0xf]
      %v322 = vld [vmem:[%s2] sm:$0xf]
      %v323 = vld [vmem:[%s2 + $0x4] sm:$0xf]
      %v324 = vld [vmem:[%s281 + $0x4] sm:$0x1]
      %v325 = vld [vmem:[%s281 + $0xc] sm:$0x1]
      %v326 = vld [vmem:[%s281 + $0x14] sm:$0x1]
      %v327 = vld [vmem:[%s281 + $0x1c] sm:$0x1]
      %v328 = vld [vmem:[%s281 + $0x24] sm:$0x1]
      %v329 = vld [vmem:[%s281 + $0x2c] sm:$0x1]
      %v330 = vld [vmem:[%s281 + $0x34] sm:$0x1]
      %v331 = vld [vmem:[%s281 + $0x3c] sm:$0x1]
      %vm332 = vsmask.f32 3328
      %vm333 = vsmask.f32 7440
      %vm334 = vmor %vm332, %vm333
      %v336 = vshrl.u32 %v314, 16
      %v338 = vrot.slane %v336, 4
      %v339 = vshll.u32 %v314, 16
      %v341 = vrot.slane %v339, 5
      %v342 = vor.u32 %v338, %v341
      %v343 = vrot.slane %v342, 4
      %v345 = vshll.u32 %v324, 16
      %v347 = vrot.slane %v345, 5
      %v348 = vsel %vm334, %v343, %v347
      %v350 = vshrl.u32 %v315, 16
      %v352 = vrot.slane %v350, 4
      %v353 = vshll.u32 %v315, 16
      %v355 = vrot.slane %v353, 5
      %v356 = vor.u32 %v352, %v355
      %v357 = vrot.slane %v356, 4
      %v359 = vshll.u32 %v325, 16
      %v361 = vrot.slane %v359, 5
      %v362 = vsel %vm334, %v357, %v361
      %v364 = vshrl.u32 %v316, 16
      %v366 = vrot.slane %v364, 4
      %v367 = vshll.u32 %v316, 16
      %v369 = vrot.slane %v367, 5
      %v370 = vor.u32 %v366, %v369
      %v371 = vrot.slane %v370, 4
      %v373 = vshll.u32 %v326, 16
      %v375 = vrot.slane %v373, 5
      %v376 = vsel %vm334, %v371, %v375
      %v378 = vshrl.u32 %v317, 16
      %v380 = vrot.slane %v378, 4
      %v381 = vshll.u32 %v317, 16
      %v383 = vrot.slane %v381, 5
      %v384 = vor.u32 %v380, %v383
      %v385 = vrot.slane %v384, 4
      %v387 = vshll.u32 %v327, 16
      %v389 = vrot.slane %v387, 5
      %v390 = vsel %vm334, %v385, %v389
      %v392 = vshrl.u32 %v318, 16
      %v394 = vrot.slane %v392, 4
      %v395 = vshll.u32 %v318, 16
      %v397 = vrot.slane %v395, 5
      %v398 = vor.u32 %v394, %v397
      %v399 = vrot.slane %v398, 4
      %v401 = vshll.u32 %v328, 16
      %v403 = vrot.slane %v401, 5
      %v404 = vsel %vm334, %v399, %v403
      %v406 = vshrl.u32 %v319, 16
      %v408 = vrot.slane %v406, 4
      %v409 = vshll.u32 %v319, 16
      %v411 = vrot.slane %v409, 5
      %v412 = vor.u32 %v408, %v411
      %v413 = vrot.slane %v412, 4
      %v415 = vshll.u32 %v329, 16
      %v417 = vrot.slane %v415, 5
      %v418 = vsel %vm334, %v413, %v417
      %v420 = vshrl.u32 %v320, 16
      %v422 = vrot.slane %v420, 4
      %v423 = vshll.u32 %v320, 16
      %v425 = vrot.slane %v423, 5
      %v426 = vor.u32 %v422, %v425
      %v427 = vrot.slane %v426, 4
      %v429 = vshll.u32 %v330, 16
      %v431 = vrot.slane %v429, 5
      %v432 = vsel %vm334, %v427, %v431
      %v434 = vshrl.u32 %v321, 16
      %v436 = vrot.slane %v434, 4
      %v437 = vshll.u32 %v321, 16
      %v439 = vrot.slane %v437, 5
      %v440 = vor.u32 %v436, %v439
      %v441 = vrot.slane %v440, 4
      %v443 = vshll.u32 %v331, 16
      %v445 = vrot.slane %v443, 5
      %v446 = vsel %vm334, %v441, %v445
      %s447 = scalar_lea.vmem %s2, 8
      %v448 = vld [vmem:[%s447] sm:$0xf]
      %v449 = vld [vmem:[%s447 + $0x4] sm:$0xf]
      %v450 = vunpack.c.l.b16 %v348
      %v451 = vunpack.c.l.b16 %v362
      %v452 = vunpack.c.l.b16 %v376
      %v453 = vunpack.c.l.b16 %v390
      %v454 = vunpack.c.l.b16 %v404
      %v455 = vunpack.c.l.b16 %v418
      %v456 = vunpack.c.l.b16 %v432
      %v457 = vunpack.c.l.b16 %v446
      %v458 = vpack.c.b16 %v451, %v450
      %v459 = vpack.c.b16 %v453, %v452
      %v460 = vpack.c.b16 %v455, %v454
      %v461 = vpack.c.b16 %v457, %v456
      %v464 = vunpack.c.l.b16 %v448
      %v465 = vunpack.c.l.b16 %v449
      %v466 = vpack.c.b16 %v465, %v464
      %vm468 = vcmask 130048
      %v470 = vsel %vm468, %v458, 0
      %v473 = vsel %vm468, %v459, 0
      %v476 = vsel %vm468, %v460, 0
      %v479 = vsel %vm468, %v461, 0
      %481 = vmatprep.subr.bf16.mxu0 0
      %482 = vmatpush1.bf16.msra.mxu0 0
      %483 = vmatprep.subr.bf16.mxu0 0
      %484 = vmatpush1.bf16.msra.mxu0 0
      %485 = vmatprep.subr.bf16.mxu0 0
      %486 = vmatpush1.bf16.msra.mxu0 0
      %487 = vmatprep.subr.bf16.mxu0 0
      %488 = vmatpush1.bf16.msra.mxu0 0
      %489 = vmatprep.subr.bf16.mxu0 0
      %490 = vmatpush1.bf16.msra.mxu0 0
      %491 = vmatprep.subr.bf16.mxu0 0
      %492 = vmatpush1.bf16.msra.mxu0 0
      %493 = vmatprep.subr.bf16.mxu0 0
      %494 = vmatpush1.bf16.msra.mxu0 0
      %495 = vmatprep.subr.bf16.mxu0 0
      %496 = vmatpush1.bf16.msra.mxu0 %v466
      %497 = vmatprep.subr.bf16.mxu0 0
      %498 = vmatpush2.bf16.msra.mxu0 0
      %499 = vmatprep.subr.bf16.mxu0 0
      %500 = vmatpush2.bf16.msra.mxu0 0
      %501 = vmatprep.subr.bf16.mxu0 0
      %502 = vmatpush2.bf16.msra.mxu0 0
      %503 = vmatprep.subr.bf16.mxu0 0
      %504 = vmatpush2.bf16.msra.mxu0 0
      %505 = vmatprep.subr.bf16.mxu0 0
      %506 = vmatpush2.bf16.msra.mxu0 0
      %507 = vmatprep.subr.bf16.mxu0 0
      %508 = vmatpush2.bf16.msra.mxu0 0
      %509 = vmatprep.subr.bf16.mxu0 0
      %510 = vmatpush2.bf16.msra.mxu0 0
      %511 = vmatprep.subr.bf16.mxu0 0
      %512 = vmatpush2.bf16.msra.mxu0 0
      %513 = vmatprep.mubr.bf16.mxu0 0
      %514 = vmatmul.mubr.bf16.gmra.mxu0 %v470
      %v515 = vpop.f32.mrf.mxu0
      %v516 = vadd.f32 0.0, %v515
      %v517 = vpop.f32.mrf.mxu0
      %v518 = vpop.f32.mrf.mxu0
      %v519 = vadd.f32 0.0, %v518
      %v520 = vpop.f32.mrf.mxu0
      %521 = vmatprep.mubr.bf16.mxu0 0
      %522 = vmatmul.mubr.bf16.gmra.mxu0 %v473
      %v523 = vpop.f32.mrf.mxu0
      %v524 = vadd.f32 0.0, %v523
      %v525 = vpop.f32.mrf.mxu0
      %v526 = vpop.f32.mrf.mxu0
      %v527 = vadd.f32 0.0, %v526
      %v528 = vpop.f32.mrf.mxu0
      %529 = vmatprep.mubr.bf16.mxu0 0
      %530 = vmatmul.mubr.bf16.gmra.mxu0 %v476
      %v531 = vpop.f32.mrf.mxu0
      %v532 = vadd.f32 0.0, %v531
      %v533 = vpop.f32.mrf.mxu0
      %v534 = vpop.f32.mrf.mxu0
      %v535 = vadd.f32 0.0, %v534
      %v536 = vpop.f32.mrf.mxu0
      %537 = vmatprep.mubr.bf16.mxu0 0
      %538 = vmatmul.mubr.bf16.gmra.mxu0 %v479
      %v539 = vpop.f32.mrf.mxu0
      %v540 = vadd.f32 0.0, %v539
      %v541 = vpop.f32.mrf.mxu0
      %v542 = vpop.f32.mrf.mxu0
      %v543 = vadd.f32 0.0, %v542
      %v544 = vpop.f32.mrf.mxu0
      %545 = vdwg.mxu0
      %v554 = vunpack.c.l.b16 %v314
      %v555 = vunpack.c.l.b16 %v315
      %v556 = vunpack.c.l.b16 %v316
      %v557 = vunpack.c.l.b16 %v317
      %v558 = vunpack.c.l.b16 %v318
      %v559 = vunpack.c.l.b16 %v319
      %v560 = vunpack.c.l.b16 %v320
      %v561 = vunpack.c.l.b16 %v321
      %v562 = vpack.c.b16 %v555, %v554
      %v563 = vpack.c.b16 %v557, %v556
      %v564 = vpack.c.b16 %v559, %v558
      %v565 = vpack.c.b16 %v561, %v560
      %v568 = vunpack.c.l.b16 %v322
      %v569 = vunpack.c.l.b16 %v323
      %v570 = vpack.c.b16 %v569, %v568
      %v573 = vsel %vm468, %v562, 0
      %v576 = vsel %vm468, %v563, 0
      %v579 = vsel %vm468, %v564, 0
      %v582 = vsel %vm468, %v565, 0
      %584 = vmatprep.subr.bf16.mxu0 0
      %585 = vmatpush1.bf16.msra.mxu0 0
      %586 = vmatprep.subr.bf16.mxu0 0
      %587 = vmatpush1.bf16.msra.mxu0 0
      %588 = vmatprep.subr.bf16.mxu0 0
      %589 = vmatpush1.bf16.msra.mxu0 0
      %590 = vmatprep.subr.bf16.mxu0 0
      %591 = vmatpush1.bf16.msra.mxu0 0
      %592 = vmatprep.subr.bf16.mxu0 0
      %593 = vmatpush1.bf16.msra.mxu0 0
      %594 = vmatprep.subr.bf16.mxu0 0
      %595 = vmatpush1.bf16.msra.mxu0 0
      %596 = vmatprep.subr.bf16.mxu0 0
      %597 = vmatpush1.bf16.msra.mxu0 0
      %598 = vmatprep.subr.bf16.mxu0 0
      %599 = vmatpush1.bf16.msra.mxu0 %v570
      %600 = vmatprep.subr.bf16.mxu0 0
      %601 = vmatpush2.bf16.msra.mxu0 0
      %602 = vmatprep.subr.bf16.mxu0 0
      %603 = vmatpush2.bf16.msra.mxu0 0
      %604 = vmatprep.subr.bf16.mxu0 0
      %605 = vmatpush2.bf16.msra.mxu0 0
      %606 = vmatprep.subr.bf16.mxu0 0
      %607 = vmatpush2.bf16.msra.mxu0 0
      %608 = vmatprep.subr.bf16.mxu0 0
      %609 = vmatpush2.bf16.msra.mxu0 0
      %610 = vmatprep.subr.bf16.mxu0 0
      %611 = vmatpush2.bf16.msra.mxu0 0
      %612 = vmatprep.subr.bf16.mxu0 0
      %613 = vmatpush2.bf16.msra.mxu0 0
      %614 = vmatprep.subr.bf16.mxu0 0
      %615 = vmatpush2.bf16.msra.mxu0 0
      %616 = vmatprep.mubr.bf16.mxu0 0
      %617 = vmatmul.mubr.bf16.gmra.mxu0 %v573
      %v618 = vpop.f32.mrf.mxu0
      %v619 = vadd.f32 %v516, %v618
      %v620 = vpop.f32.mrf.mxu0
      %v621 = vpop.f32.mrf.mxu0
      %v622 = vadd.f32 %v519, %v621
      %v623 = vpop.f32.mrf.mxu0
      %624 = vmatprep.mubr.bf16.mxu0 0
      %625 = vmatmul.mubr.bf16.gmra.mxu0 %v576
      %v626 = vpop.f32.mrf.mxu0
      %v627 = vadd.f32 %v524, %v626
      %v628 = vpop.f32.mrf.mxu0
      %v629 = vpop.f32.mrf.mxu0
      %v630 = vadd.f32 %v527, %v629
      %v631 = vpop.f32.mrf.mxu0
      %632 = vmatprep.mubr.bf16.mxu0 0
      %633 = vmatmul.mubr.bf16.gmra.mxu0 %v579
      %v634 = vpop.f32.mrf.mxu0
      %v635 = vadd.f32 %v532, %v634
      %v636 = vpop.f32.mrf.mxu0
      %v637 = vpop.f32.mrf.mxu0
      %v638 = vadd.f32 %v535, %v637
      %v639 = vpop.f32.mrf.mxu0
      %640 = vmatprep.mubr.bf16.mxu0 0
      %641 = vmatmul.mubr.bf16.gmra.mxu0 %v582
      %v642 = vpop.f32.mrf.mxu0
      %v643 = vadd.f32 %v540, %v642
      %v644 = vpop.f32.mrf.mxu0
      %v645 = vpop.f32.mrf.mxu0
      %v646 = vadd.f32 %v543, %v645
      %v647 = vpop.f32.mrf.mxu0
      %648 = vdwg.mxu0
      %649 = vst [vmem:[#allocation2] sm:$0xff] %v619
      %650 = vst [vmem:[#allocation2 + $0x8] sm:$0xff] %v622
      %651 = vst [vmem:[#allocation2 + $0x10] sm:$0xff] %v627
      %652 = vst [vmem:[#allocation2 + $0x18] sm:$0xff] %v630
      %653 = vst [vmem:[#allocation2 + $0x20] sm:$0xff] %v635
      %654 = vst [vmem:[#allocation2 + $0x28] sm:$0xff] %v638
      %655 = vst [vmem:[#allocation2 + $0x30] sm:$0xff] %v643
      %656 = vst [vmem:[#allocation2 + $0x38] sm:$0xff] %v646
      %v657 = vld [vmem:[#allocation2] sm:$0xff]
      %v658 = vld [vmem:[#allocation2 + $0x8] sm:$0xff]
      %v659 = vld [vmem:[#allocation2 + $0x10] sm:$0xff]
      %v660 = vld [vmem:[#allocation2 + $0x18] sm:$0xff]
      %v661 = vld [vmem:[#allocation2 + $0x20] sm:$0xff]
      %v662 = vld [vmem:[#allocation2 + $0x28] sm:$0xff]
      %v663 = vld [vmem:[#allocation2 + $0x30] sm:$0xff]
      %s664 = scalar_lea.vmem %s281, 8
      %v665 = vld [vmem:[%s664] sm:$0xf]
      %v666 = vld [vmem:[%s664 + $0x8] sm:$0xf]
      %v667 = vld [vmem:[%s664 + $0x10] sm:$0xf]
      %v668 = vld [vmem:[%s664 + $0x18] sm:$0xf]
      %v669 = vld [vmem:[%s664 + $0x20] sm:$0xf]
      %v670 = vld [vmem:[%s664 + $0x28] sm:$0xf]
      %v671 = vld [vmem:[%s664 + $0x30] sm:$0xf]
      %s672 = scalar_lea.vmem %s2, 16
      %v673 = vld [vmem:[%s672] sm:$0xf]
      %v674 = vld [vmem:[%s672 + $0x4] sm:$0xf]
      %v675 = vld [vmem:[%s664 + $0x4] sm:$0x1]
      %v676 = vld [vmem:[%s664 + $0xc] sm:$0x1]
      %v677 = vld [vmem:[%s664 + $0x14] sm:$0x1]
      %v678 = vld [vmem:[%s664 + $0x1c] sm:$0x1]
      %v679 = vld [vmem:[%s664 + $0x24] sm:$0x1]
      %v680 = vld [vmem:[%s664 + $0x2c] sm:$0x1]
      %v681 = vld [vmem:[%s664 + $0x34] sm:$0x1]
      %v683 = vshrl.u32 %v665, 16
      %v685 = vrot.slane %v683, 4
      %v686 = vshll.u32 %v665, 16
      %v688 = vrot.slane %v686, 5
      %v689 = vor.u32 %v685, %v688
      %v690 = vrot.slane %v689, 4
      %v692 = vshll.u32 %v675, 16
      %v694 = vrot.slane %v692, 5
      %v695 = vsel %vm334, %v690, %v694
      %v697 = vshrl.u32 %v666, 16
      %v699 = vrot.slane %v697, 4
      %v700 = vshll.u32 %v666, 16
      %v702 = vrot.slane %v700, 5
      %v703 = vor.u32 %v699, %v702
      %v704 = vrot.slane %v703, 4
      %v706 = vshll.u32 %v676, 16
      %v708 = vrot.slane %v706, 5
      %v709 = vsel %vm334, %v704, %v708
      %v711 = vshrl.u32 %v667, 16
      %v713 = vrot.slane %v711, 4
      %v714 = vshll.u32 %v667, 16
      %v716 = vrot.slane %v714, 5
      %v717 = vor.u32 %v713, %v716
      %v718 = vrot.slane %v717, 4
      %v720 = vshll.u32 %v677, 16
      %v722 = vrot.slane %v720, 5
      %v723 = vsel %vm334, %v718, %v722
      %v725 = vshrl.u32 %v668, 16
      %v727 = vrot.slane %v725, 4
      %v728 = vshll.u32 %v668, 16
      %v730 = vrot.slane %v728, 5
      %v731 = vor.u32 %v727, %v730
      %v732 = vrot.slane %v731, 4
      %v734 = vshll.u32 %v678, 16
      %v736 = vrot.slane %v734, 5
      %v737 = vsel %vm334, %v732, %v736
      %v739 = vshrl.u32 %v669, 16
      %v741 = vrot.slane %v739, 4
      %v742 = vshll.u32 %v669, 16
      %v744 = vrot.slane %v742, 5
      %v745 = vor.u32 %v741, %v744
      %v746 = vrot.slane %v745, 4
      %v748 = vshll.u32 %v679, 16
      %v750 = vrot.slane %v748, 5
      %v751 = vsel %vm334, %v746, %v750
      %v753 = vshrl.u32 %v670, 16
      %v755 = vrot.slane %v753, 4
      %v756 = vshll.u32 %v670, 16
      %v758 = vrot.slane %v756, 5
      %v759 = vor.u32 %v755, %v758
      %v760 = vrot.slane %v759, 4
      %v762 = vshll.u32 %v680, 16
      %v764 = vrot.slane %v762, 5
      %v765 = vsel %vm334, %v760, %v764
      %v767 = vshrl.u32 %v671, 16
      %v769 = vrot.slane %v767, 4
      %v770 = vshll.u32 %v671, 16
      %v772 = vrot.slane %v770, 5
      %v773 = vor.u32 %v769, %v772
      %v774 = vrot.slane %v773, 4
      %v776 = vshll.u32 %v681, 16
      %v778 = vrot.slane %v776, 5
      %v779 = vsel %vm334, %v774, %v778
      %s780 = scalar_lea.vmem %s2, 24
      %v781 = vld [vmem:[%s780] sm:$0xf]
      %v782 = vld [vmem:[%s780 + $0x4] sm:$0xf]
      %v783 = vunpack.c.l.b16 %v695
      %v784 = vunpack.c.l.b16 %v709
      %v785 = vunpack.c.l.b16 %v723
      %v786 = vunpack.c.l.b16 %v737
      %v787 = vunpack.c.l.b16 %v751
      %v788 = vunpack.c.l.b16 %v765
      %v789 = vunpack.c.l.b16 %v779
      %v790 = vpack.c.b16 %v784, %v783
      %v791 = vpack.c.b16 %v786, %v785
      %v792 = vpack.c.b16 %v788, %v787
      %v793 = vpack.c.b16 %v789, %v789
      %v796 = vunpack.c.l.b16 %v781
      %v797 = vunpack.c.l.b16 %v782
      %v798 = vpack.c.b16 %v797, %v796
      %v801 = vsel %vm468, %v790, 0
      %v804 = vsel %vm468, %v791, 0
      %v807 = vsel %vm468, %v792, 0
      %v810 = vsel %vm468, %v793, 0
      %812 = vmatprep.subr.bf16.mxu0 0
      %813 = vmatpush1.bf16.msra.mxu0 0
      %814 = vmatprep.subr.bf16.mxu0 0
      %815 = vmatpush1.bf16.msra.mxu0 0
      %816 = vmatprep.subr.bf16.mxu0 0
      %817 = vmatpush1.bf16.msra.mxu0 0
      %818 = vmatprep.subr.bf16.mxu0 0
      %819 = vmatpush1.bf16.msra.mxu0 0
      %820 = vmatprep.subr.bf16.mxu0 0
      %821 = vmatpush1.bf16.msra.mxu0 0
      %822 = vmatprep.subr.bf16.mxu0 0
      %823 = vmatpush1.bf16.msra.mxu0 0
      %824 = vmatprep.subr.bf16.mxu0 0
      %825 = vmatpush1.bf16.msra.mxu0 0
      %826 = vmatprep.subr.bf16.mxu0 0
      %827 = vmatpush1.bf16.msra.mxu0 %v798
      %828 = vmatprep.subr.bf16.mxu0 0
      %829 = vmatpush2.bf16.msra.mxu0 0
      %830 = vmatprep.subr.bf16.mxu0 0
      %831 = vmatpush2.bf16.msra.mxu0 0
      %832 = vmatprep.subr.bf16.mxu0 0
      %833 = vmatpush2.bf16.msra.mxu0 0
      %834 = vmatprep.subr.bf16.mxu0 0
      %835 = vmatpush2.bf16.msra.mxu0 0
      %836 = vmatprep.subr.bf16.mxu0 0
      %837 = vmatpush2.bf16.msra.mxu0 0
      %838 = vmatprep.subr.bf16.mxu0 0
      %839 = vmatpush2.bf16.msra.mxu0 0
      %840 = vmatprep.subr.bf16.mxu0 0
      %841 = vmatpush2.bf16.msra.mxu0 0
      %842 = vmatprep.subr.bf16.mxu0 0
      %843 = vmatpush2.bf16.msra.mxu0 0
      %844 = vmatprep.mubr.bf16.mxu0 0
      %845 = vmatmul.mubr.bf16.gmra.mxu0 %v801
      %v846 = vpop.f32.mrf.mxu0
      %v847 = vadd.f32 0.0, %v846
      %v848 = vpop.f32.mrf.mxu0
      %v849 = vpop.f32.mrf.mxu0
      %v850 = vadd.f32 0.0, %v849
      %v851 = vpop.f32.mrf.mxu0
      %852 = vmatprep.mubr.bf16.mxu0 0
      %853 = vmatmul.mubr.bf16.gmra.mxu0 %v804
      %v854 = vpop.f32.mrf.mxu0
      %v855 = vadd.f32 0.0, %v854
      %v856 = vpop.f32.mrf.mxu0
      %v857 = vpop.f32.mrf.mxu0
      %v858 = vadd.f32 0.0, %v857
      %v859 = vpop.f32.mrf.mxu0
      %860 = vmatprep.mubr.bf16.mxu0 0
      %861 = vmatmul.mubr.bf16.gmra.mxu0 %v807
      %v862 = vpop.f32.mrf.mxu0
      %v863 = vadd.f32 0.0, %v862
      %v864 = vpop.f32.mrf.mxu0
      %v865 = vpop.f32.mrf.mxu0
      %v866 = vadd.f32 0.0, %v865
      %v867 = vpop.f32.mrf.mxu0
      %868 = vmatprep.mubr.bf16.mxu0 0
      %869 = vmatmul.mubr.bf16.gmra.mxu0 %v810
      %v870 = vpop.f32.mrf.mxu0
      %v871 = vadd.f32 0.0, %v870
      %v872 = vpop.f32.mrf.mxu0
      %v873 = vpop.f32.mrf.mxu0
      %v874 = vpop.f32.mrf.mxu0
      %875 = vdwg.mxu0
      %v883 = vunpack.c.l.b16 %v665
      %v884 = vunpack.c.l.b16 %v666
      %v885 = vunpack.c.l.b16 %v667
      %v886 = vunpack.c.l.b16 %v668
      %v887 = vunpack.c.l.b16 %v669
      %v888 = vunpack.c.l.b16 %v670
      %v889 = vunpack.c.l.b16 %v671
      %v890 = vpack.c.b16 %v884, %v883
      %v891 = vpack.c.b16 %v886, %v885
      %v892 = vpack.c.b16 %v888, %v887
      %v893 = vpack.c.b16 %v889, %v889
      %v896 = vunpack.c.l.b16 %v673
      %v897 = vunpack.c.l.b16 %v674
      %v898 = vpack.c.b16 %v897, %v896
      %v901 = vsel %vm468, %v890, 0
      %v904 = vsel %vm468, %v891, 0
      %v907 = vsel %vm468, %v892, 0
      %v910 = vsel %vm468, %v893, 0
      %912 = vmatprep.subr.bf16.mxu0 0
      %913 = vmatpush1.bf16.msra.mxu0 0
      %914 = vmatprep.subr.bf16.mxu0 0
      %915 = vmatpush1.bf16.msra.mxu0 0
      %916 = vmatprep.subr.bf16.mxu0 0
      %917 = vmatpush1.bf16.msra.mxu0 0
      %918 = vmatprep.subr.bf16.mxu0 0
      %919 = vmatpush1.bf16.msra.mxu0 0
      %920 = vmatprep.subr.bf16.mxu0 0
      %921 = vmatpush1.bf16.msra.mxu0 0
      %922 = vmatprep.subr.bf16.mxu0 0
      %923 = vmatpush1.bf16.msra.mxu0 0
      %924 = vmatprep.subr.bf16.mxu0 0
      %925 = vmatpush1.bf16.msra.mxu0 0
      %926 = vmatprep.subr.bf16.mxu0 0
      %927 = vmatpush1.bf16.msra.mxu0 %v898
      %928 = vmatprep.subr.bf16.mxu0 0
      %929 = vmatpush2.bf16.msra.mxu0 0
      %930 = vmatprep.subr.bf16.mxu0 0
      %931 = vmatpush2.bf16.msra.mxu0 0
      %932 = vmatprep.subr.bf16.mxu0 0
      %933 = vmatpush2.bf16.msra.mxu0 0
      %934 = vmatprep.subr.bf16.mxu0 0
      %935 = vmatpush2.bf16.msra.mxu0 0
      %936 = vmatprep.subr.bf16.mxu0 0
      %937 = vmatpush2.bf16.msra.mxu0 0
      %938 = vmatprep.subr.bf16.mxu0 0
      %939 = vmatpush2.bf16.msra.mxu0 0
      %940 = vmatprep.subr.bf16.mxu0 0
      %941 = vmatpush2.bf16.msra.mxu0 0
      %942 = vmatprep.subr.bf16.mxu0 0
      %943 = vmatpush2.bf16.msra.mxu0 0
      %944 = vmatprep.mubr.bf16.mxu0 0
      %945 = vmatmul.mubr.bf16.gmra.mxu0 %v901
      %v946 = vpop.f32.mrf.mxu0
      %v947 = vadd.f32 %v847, %v946
      %v948 = vpop.f32.mrf.mxu0
      %v949 = vpop.f32.mrf.mxu0
      %v950 = vadd.f32 %v850, %v949
      %v951 = vpop.f32.mrf.mxu0
      %952 = vmatprep.mubr.bf16.mxu0 0
      %953 = vmatmul.mubr.bf16.gmra.mxu0 %v904
      %v954 = vpop.f32.mrf.mxu0
      %v955 = vadd.f32 %v855, %v954
      %v956 = vpop.f32.mrf.mxu0
      %v957 = vpop.f32.mrf.mxu0
      %v958 = vadd.f32 %v858, %v957
      %v959 = vpop.f32.mrf.mxu0
      %960 = vmatprep.mubr.bf16.mxu0 0
      %961 = vmatmul.mubr.bf16.gmra.mxu0 %v907
      %v962 = vpop.f32.mrf.mxu0
      %v963 = vadd.f32 %v863, %v962
      %v964 = vpop.f32.mrf.mxu0
      %v965 = vpop.f32.mrf.mxu0
      %v966 = vadd.f32 %v866, %v965
      %v967 = vpop.f32.mrf.mxu0
      %968 = vmatprep.mubr.bf16.mxu0 0
      %969 = vmatmul.mubr.bf16.gmra.mxu0 %v910
      %v970 = vpop.f32.mrf.mxu0
      %v971 = vadd.f32 %v871, %v970
      %v972 = vpop.f32.mrf.mxu0
      %v973 = vpop.f32.mrf.mxu0
      %v974 = vpop.f32.mrf.mxu0
      %975 = vdwg.mxu0
      %v976 = vadd.f32 %v657, %v947
      %v977 = vadd.f32 %v658, %v950
      %v978 = vadd.f32 %v659, %v955
      %v979 = vadd.f32 %v660, %v958
      %v980 = vadd.f32 %v661, %v963
      %v981 = vadd.f32 %v662, %v966
      %v982 = vadd.f32 %v663, %v971
      %983 = vst [vmem:[#allocation2] sm:$0xff] %v976
      %984 = vst [vmem:[#allocation2 + $0x8] sm:$0xff] %v977
      %985 = vst [vmem:[#allocation2 + $0x10] sm:$0xff] %v978
      %986 = vst [vmem:[#allocation2 + $0x18] sm:$0xff] %v979
      %987 = vst [vmem:[#allocation2 + $0x20] sm:$0xff] %v980
      %988 = vst [vmem:[#allocation2 + $0x28] sm:$0xff] %v981
      %989 = vst [vmem:[#allocation2 + $0x30] sm:$0xff] %v982
      %v990 = vld [vmem:[#allocation2 + $0x38] sm:$0xff]
      %v991 = vld [vmem:[%s298] sm:$0xf]
      %v992 = vld [vmem:[%s672] sm:$0xf]
      %v993 = vld [vmem:[%s672 + $0x4] sm:$0xf]
      %v994 = vld [vmem:[%s298 + $0x4] sm:$0x1]
      %v995 = vld [vmem:[%s780] sm:$0xf]
      %v996 = vld [vmem:[%s780 + $0x4] sm:$0xf]
      %v999 = vunpack.c.l.b16 %v991
      %v1000 = vunpack.c.l.b16 %v994
      %v1001 = vpack.c.b16 %v1000, %v999
      %v1003 = vshrl.u32 %v1001, 16
      %v1005 = vshll.u32 %v1001, 16
      %v1007 = vrot.slane %v1005, 1
      %v1008 = vor.u32 %v1003, %v1007
      %v1011 = vunpack.c.l.b16 %v995
      %v1012 = vunpack.c.l.b16 %v996
      %v1013 = vpack.c.b16 %v1012, %v1011
      %v1016 = vsel %vm468, %v1008, 0
      %1018 = vmatprep.subr.bf16.mxu0 0
      %1019 = vmatpush1.bf16.msra.mxu0 0
      %1020 = vmatprep.subr.bf16.mxu0 0
      %1021 = vmatpush1.bf16.msra.mxu0 0
      %1022 = vmatprep.subr.bf16.mxu0 0
      %1023 = vmatpush1.bf16.msra.mxu0 0
      %1024 = vmatprep.subr.bf16.mxu0 0
      %1025 = vmatpush1.bf16.msra.mxu0 0
      %1026 = vmatprep.subr.bf16.mxu0 0
      %1027 = vmatpush1.bf16.msra.mxu0 0
      %1028 = vmatprep.subr.bf16.mxu0 0
      %1029 = vmatpush1.bf16.msra.mxu0 0
      %1030 = vmatprep.subr.bf16.mxu0 0
      %1031 = vmatpush1.bf16.msra.mxu0 0
      %1032 = vmatprep.subr.bf16.mxu0 0
      %1033 = vmatpush1.bf16.msra.mxu0 %v1013
      %1034 = vmatprep.subr.bf16.mxu0 0
      %1035 = vmatpush2.bf16.msra.mxu0 0
      %1036 = vmatprep.subr.bf16.mxu0 0
      %1037 = vmatpush2.bf16.msra.mxu0 0
      %1038 = vmatprep.subr.bf16.mxu0 0
      %1039 = vmatpush2.bf16.msra.mxu0 0
      %1040 = vmatprep.subr.bf16.mxu0 0
      %1041 = vmatpush2.bf16.msra.mxu0 0
      %1042 = vmatprep.subr.bf16.mxu0 0
      %1043 = vmatpush2.bf16.msra.mxu0 0
      %1044 = vmatprep.subr.bf16.mxu0 0
      %1045 = vmatpush2.bf16.msra.mxu0 0
      %1046 = vmatprep.subr.bf16.mxu0 0
      %1047 = vmatpush2.bf16.msra.mxu0 0
      %1048 = vmatprep.subr.bf16.mxu0 0
      %1049 = vmatpush2.bf16.msra.mxu0 0
      %1050 = vmatprep.mubr.bf16.mxu0 0
      %1051 = vmatmul.mubr.bf16.gmra.mxu0 %v1016
      %v1052 = vpop.f32.mrf.mxu0
      %v1053 = vadd.f32 0.0, %v1052
      %v1054 = vpop.f32.mrf.mxu0
      %v1055 = vpop.f32.mrf.mxu0
      %v1056 = vpop.f32.mrf.mxu0
      %1057 = vdwg.mxu0
      %v1060 = vunpack.c.l.b16 %v992
      %v1061 = vunpack.c.l.b16 %v993
      %v1062 = vpack.c.b16 %v1061, %v1060
      %v1065 = vsel %vm468, %v991, 0
      %1067 = vmatprep.subr.bf16.mxu0 0
      %1068 = vmatpush1.bf16.msra.mxu0 0
      %1069 = vmatprep.subr.bf16.mxu0 0
      %1070 = vmatpush1.bf16.msra.mxu0 0
      %1071 = vmatprep.subr.bf16.mxu0 0
      %1072 = vmatpush1.bf16.msra.mxu0 0
      %1073 = vmatprep.subr.bf16.mxu0 0
      %1074 = vmatpush1.bf16.msra.mxu0 0
      %1075 = vmatprep.subr.bf16.mxu0 0
      %1076 = vmatpush1.bf16.msra.mxu0 0
      %1077 = vmatprep.subr.bf16.mxu0 0
      %1078 = vmatpush1.bf16.msra.mxu0 0
      %1079 = vmatprep.subr.bf16.mxu0 0
      %1080 = vmatpush1.bf16.msra.mxu0 0
      %1081 = vmatprep.subr.bf16.mxu0 0
      %1082 = vmatpush1.bf16.msra.mxu0 %v1062
      %1083 = vmatprep.subr.bf16.mxu0 0
      %1084 = vmatpush2.bf16.msra.mxu0 0
      %1085 = vmatprep.subr.bf16.mxu0 0
      %1086 = vmatpush2.bf16.msra.mxu0 0
      %1087 = vmatprep.subr.bf16.mxu0 0
      %1088 = vmatpush2.bf16.msra.mxu0 0
      %1089 = vmatprep.subr.bf16.mxu0 0
      %1090 = vmatpush2.bf16.msra.mxu0 0
      %1091 = vmatprep.subr.bf16.mxu0 0
      %1092 = vmatpush2.bf16.msra.mxu0 0
      %1093 = vmatprep.subr.bf16.mxu0 0
      %1094 = vmatpush2.bf16.msra.mxu0 0
      %1095 = vmatprep.subr.bf16.mxu0 0
      %1096 = vmatpush2.bf16.msra.mxu0 0
      %1097 = vmatprep.subr.bf16.mxu0 0
      %1098 = vmatpush2.bf16.msra.mxu0 0
      %1099 = vmatprep.mubr.bf16.mxu0 0
      %1100 = vmatmul.mubr.bf16.gmra.mxu0 %v1065
      %v1101 = vpop.f32.mrf.mxu0
      %v1102 = vadd.f32 %v1053, %v1101
      %v1103 = vpop.f32.mrf.mxu0
      %v1104 = vpop.f32.mrf.mxu0
      %v1105 = vpop.f32.mrf.mxu0
      %1106 = vdwg.mxu0
      %v1107 = vadd.f32 %v990, %v1102
      %1108 = vst [vmem:[#allocation2 + $0x38] sm:$0xff] %v1107
      %v1109 = vld [vmem:[#allocation2] sm:$0xff]
      %v1110 = vld [vmem:[#allocation2 + $0x8] sm:$0xff]
      %v1111 = vld [vmem:[#allocation2 + $0x10] sm:$0xff]
      %v1112 = vld [vmem:[#allocation2 + $0x18] sm:$0xff]
      %v1113 = vld [vmem:[#allocation2 + $0x20] sm:$0xff]
      %v1114 = vld [vmem:[#allocation2 + $0x28] sm:$0xff]
      %v1115 = vld [vmem:[#allocation2 + $0x30] sm:$0xff]
      %v1116 = vld [vmem:[#allocation2 + $0x38] sm:$0xff]
      %v1117 = vld [vmem:[%s303] sm:$0x1]
      %v1118 = vadd.f32 %v1109, %v1110
      %v1119 = vadd.f32 %v1118, %v1111
      %v1120 = vadd.f32 %v1119, %v1112
      %v1121 = vadd.f32 %v1120, %v1113
      %v1122 = vadd.f32 %v1121, %v1114
      %v1123 = vadd.f32 %v1122, %v1115
      %v1124 = vadd.f32 %v1123, %v1116
      %v1125 = vrot.slane %v1124, 4
      %v1126 = vadd.f32 %v1124, %v1125
      %v1127 = vrot.slane %v1126, 2
      %v1128 = vadd.f32 %v1126, %v1127
      %v1129 = vrot.slane %v1128, 1
      %v1130 = vadd.f32 %v1128, %v1129
      %v1131 = vadd.f32 %v1117, %v1130
      %1132 = vst [vmem:[%s303] sm:$0x1] %v1131
      %v1133 = vld [vmem:[%s306] sm:$0x1]
      %v1134 = vmul.f32 %v1109, %v1109
      %v1135 = vmul.f32 %v1110, %v1110
      %v1136 = vmul.f32 %v1111, %v1111
      %v1137 = vmul.f32 %v1112, %v1112
      %v1138 = vmul.f32 %v1113, %v1113
      %v1139 = vmul.f32 %v1114, %v1114
      %v1140 = vmul.f32 %v1115, %v1115
      %v1141 = vmul.f32 %v1116, %v1116
      %v1142 = vadd.f32 %v1134, %v1135
      %v1143 = vadd.f32 %v1142, %v1136
      %v1144 = vadd.f32 %v1143, %v1137
      %v1145 = vadd.f32 %v1144, %v1138
      %v1146 = vadd.f32 %v1145, %v1139
      %v1147 = vadd.f32 %v1146, %v1140
      %v1148 = vadd.f32 %v1147, %v1141
      %v1149 = vrot.slane %v1148, 4
      %v1150 = vadd.f32 %v1148, %v1149
      %v1151 = vrot.slane %v1150, 2
      %v1152 = vadd.f32 %v1150, %v1151
      %v1153 = vrot.slane %v1152, 1
      %v1154 = vadd.f32 %v1152, %v1153
      %v1155 = vadd.f32 %v1133, %v1154
      %1156 = vst [vmem:[%s306] sm:$0x1] %v1155
      %p1157 = scmp.lt.s32.totalorder %s20, 1
      %s1158 = scalar_select %p1157, %s20, 1
      %s1159 = scalar_lea.vmem %s3, %s1158
      %p1160 = scmp.lt.s32.totalorder %s20, 1
      %s1161 = scalar_select %p1160, %s20, 1
      %s1162 = scalar_lea.vmem %s4, %s1161
      // Predicated region
      $region37: #{downsample.2} parent=31 // pred_check
        %p1163 = pneg %p127
      $region38: #{downsample.2} parent=31 // pred_check_branch
        %1165 = sbr.rel (%p1163) target = $region40
      $region39: #{downsample.2} parent=31 // pred_region
        _
      $region40: #{downsample.2} parent=31 // pred_fallthru
        _
      // Predicated region
      $region41: #{downsample.2} parent=31 // pred_check
        %p1166 = pneg %p153
      $region42: #{downsample.2} parent=31 // pred_check_branch
        %1168 = sbr.rel (%p1166) target = $region44
      $region43: #{downsample.2} parent=31 // pred_region
        _
      $region44: #{downsample.2} parent=31 // pred_fallthru
        _
    $region32: #{downsample.2} parent=5 // pred_fallthru
      _
    %p1169 = scmp.le.s32.totalorder 2, %s11
    // Predicated region
    $region45: #{downsample.2} parent=5 // pred_check
      %p1170 = pneg %p1169
    $region46: #{downsample.2} parent=5 // pred_check_branch
      %1172 = sbr.rel (%p1170) target = $region48
    $region47: #{downsample.2} parent=5 // pred_region
      %s1173 = ssub.s32 %s11, 2
      // Predicated region
      $region49: #{downsample.2} parent=47 // pred_check
        %p1174 = pneg %p133
      $region50: #{downsample.2} parent=47 // pred_check_branch
        %1176 = sbr.rel (%p1174) target = $region52
      $region51: #{downsample.2} parent=47 // pred_region
        %p1177 = scmp.lt.s32.totalorder %s22, 1
        %s1178 = scalar_select %p1177, %s22, 1
        %s1179 = scalar_lea.vmem %s3, %s1178
      $region52: #{downsample.2} parent=47 // pred_fallthru
        _
      // Predicated region
      $region53: #{downsample.2} parent=47 // pred_check
        %p1180 = pneg %p159
      $region54: #{downsample.2} parent=47 // pred_check_branch
        %1182 = sbr.rel (%p1180) target = $region56
      $region55: #{downsample.2} parent=47 // pred_region
        %p1183 = scmp.lt.s32.totalorder %s22, 1
        %s1184 = scalar_select %p1183, %s22, 1
        %s1185 = scalar_lea.vmem %s4, %s1184
      $region56: #{downsample.2} parent=47 // pred_fallthru
        _
    $region48: #{downsample.2} parent=5 // pred_fallthru
      _
  $region6: #{downsample.2} parent=0 // loop_footer
    %s15 = sadd.s32 1, %s11
  $region7: #{downsample.2} parent=0 // loop_footer_branch
    %10 = sbr.rel target = $region3
  $region8: #{downsample.2} parent=0 // loop_exit
    _

</llo_original>
